<compile_context>
chip_gen: v7x
topology: tpu7x:2x2x1
jax: 0.10.0
libtpu: 0.0.40
codegen_flags: <defaults>
</compile_context>

<pallas_src>
import functools

import jax
import jax.numpy as jnp
from jax import lax
from jax.experimental import pallas as pl
from jax.experimental.pallas import tpu as pltpu


def _round_up(x, m):
    return (x + m - 1) // m * m


def _pick_tile(B, tb_max):
    """Batch-tile size: small batches -> single (8-multiple) tile; large batches ->
    256-multiples capped at tb_max, and capped at ~B/2 so the grid has >=2 steps
    (keeps both v7x TensorCores busy)."""
    if B <= 256:
        return _round_up(B, 8)
    half = _round_up((B + 1) // 2, 256)
    return max(256, min(tb_max, half))


def _mlp_kernel(x_ref, w1_ref, b1_ref, w2_ref, b2_ref, w3_ref, b3_ref, o_ref):
    """Fused 3-layer MLP; batch-major input tile, features-major activations.

    x_ref : (TB, D)   f32   (raw input tile; cast to bf16 in-kernel)
    w1_ref: (512, D)  bf16     b1_ref: (512, 1) f32
    w2_ref: (128, 512) bf16    b2_ref: (128, 1) f32
    w3_ref: (128, 1)  f32      b3_ref: (1, 1)  f32 (SMEM scalar)
    o_ref : (1, TB)   f32   (lane-dense output tile)
    """
    x = x_ref[...].astype(jnp.bfloat16)

    # Layer 1: contract over D -> (512, TB), f32 MXU accumulation, bias + ReLU.
    h1 = lax.dot_general(w1_ref[...], x, (((1,), (1,)), ((), ())),
                         preferred_element_type=jnp.float32)
    h1 = jnp.maximum(h1 + b1_ref[...], 0.0)

    # Layer 2: (128, 512) @ (512, TB) -> (128, TB).
    h2 = jnp.dot(w2_ref[...], h1.astype(jnp.bfloat16),
                 preferred_element_type=jnp.float32)
    h2 = jnp.maximum(h2 + b2_ref[...], 0.0)

    # Layer 3 off the MXU: VPU multiply by the (128,1) weight column + sublane
    # reduce -> (1, TB) lane-dense result.
    out = jnp.sum(h2 * w3_ref[...], axis=0, keepdims=True)
    o_ref[...] = (out + b3_ref[0, 0]).astype(o_ref.dtype)


def prepare_params(params_f32):
    """PyTorch-layout f32 params -> kernel layout (no feature padding).

    w1/w2 stay in PyTorch (out, in) orientation, cast to bf16; b1/b2 become
    (out, 1) f32 columns; w3 becomes a (128, 1) f32 column (VPU layer 3);
    b3 becomes a (1, 1) f32 scalar for SMEM.
    """
    w1, b1, w2, b2, w3, b3 = params_f32
    return (
        w1.astype(jnp.bfloat16),
        b1.reshape(-1, 1).astype(jnp.float32),
        w2.astype(jnp.bfloat16),
        b2.reshape(-1, 1).astype(jnp.float32),
        w3.reshape(-1, 1).astype(jnp.float32),     # (128, 1) column
        b3.reshape(1, 1).astype(jnp.float32),
    )


def regressor_forward(x, kparams, *, tb=2048):
    """x: (B, nZones*nZones) float32 -> (B,) float32 (matches .view(-1))."""
    w1, b1, w2, b2, w3c, b3 = kparams
    B, D = x.shape

    tb_eff = _pick_tile(B, tb)
    Bp = _round_up(B, tb_eff)
    if Bp != B:
        # Tail pad only (no transpose/cast copy of x); padded rows are sliced off.
        x = jnp.pad(x, ((0, Bp - B), (0, 0)))
    grid = (Bp // tb_eff,)

    flops = 2 * Bp * (D * 512 + 512 * 128 + 128)
    bytes_accessed = (Bp * D * 4 + Bp * 4
                      + w1.size * 2 + w2.size * 2
                      + (b1.size + b2.size + w3c.size + b3.size) * 4)

    out = pl.pallas_call(
        _mlp_kernel,
        out_shape=jax.ShapeDtypeStruct((1, Bp), jnp.float32),
        grid=grid,
        in_specs=[
            pl.BlockSpec((tb_eff, D), lambda i: (i, 0)),          # x tile (batch slice)
            pl.BlockSpec(w1.shape, lambda i: (0, 0)),             # VMEM-resident weights
            pl.BlockSpec(b1.shape, lambda i: (0, 0)),
            pl.BlockSpec(w2.shape, lambda i: (0, 0)),
            pl.BlockSpec(b2.shape, lambda i: (0, 0)),
            pl.BlockSpec(w3c.shape, lambda i: (0, 0)),
            pl.BlockSpec(memory_space=pltpu.MemorySpace.SMEM),    # b3 scalar
        ],
        out_specs=pl.BlockSpec((1, tb_eff), lambda i: (0, i)),    # lane-dense output
        compiler_params=pltpu.CompilerParams(
            dimension_semantics=("parallel",),
            vmem_limit_bytes=32 * 1024 * 1024,
        ),
        cost_estimate=pl.CostEstimate(
            flops=flops, transcendentals=0, bytes_accessed=bytes_accessed),
    )(x, w1, b1, w2, b2, w3c, b3)

    return out[0, :B]


def init_params(key, n_zones):
    """Kaiming-uniform-style init matching nn.Linear defaults, PyTorch (out, in) layout."""
    d_in = n_zones * n_zones
    dims = [(d_in, 512), (512, 128), (128, 1)]
    params = []
    for fi, fo in dims:
        kw, kb, key = jax.random.split(key, 3)
        bound = 1.0 / jnp.sqrt(fi)
        w = jax.random.uniform(kw, (fo, fi), jnp.float32, -bound, bound)
        b = jax.random.uniform(kb, (fo,), jnp.float32, -bound, bound)
        params.extend([w, b])
    return tuple(params)


def _bf16_reference(x, kparams):
    """Same bf16-weights / f32-accumulation recipe as the kernel (tight check)."""
    w1b, b1c, w2b, b2c, w3c, b3c = kparams
    r1 = jnp.maximum(
        jnp.dot(x.astype(jnp.bfloat16), w1b.T, preferred_element_type=jnp.float32)
        + b1c.reshape(1, -1), 0.0)
    r2 = jnp.maximum(
        jnp.dot(r1.astype(jnp.bfloat16), w2b.T, preferred_element_type=jnp.float32)
        + b2c.reshape(1, -1), 0.0)
    return (r2 @ w3c + b3c).reshape(-1)


def _f32_reference(x, params_f32):
    """Full-f32 PyTorch-equivalent forward."""
    w1, b1, w2, b2, w3, b3 = params_f32
    rf = jnp.maximum(x @ w1.T + b1, 0.0)
    rf = jnp.maximum(rf @ w2.T + b2, 0.0)
    return (rf @ w3.T + b3).reshape(-1)


if __name__ == "__main__":
    n_zones = 8          # -> input feature dim = 64
    D = n_zones * n_zones

    key = jax.random.PRNGKey(0)
    kx, kx2, kp = jax.random.split(key, 3)
    params_f32 = init_params(kp, n_zones)
    kparams = prepare_params(params_f32)

    fwd = jax.jit(functools.partial(regressor_forward, tb=2048))

    # Case 1: small batch (single tile, grid=(1,)).
    batch = 8
    x = jax.random.normal(kx, (batch, D), dtype=jnp.float32)
    y = fwd(x, kparams)
    jax.block_until_ready(y)
    assert y.shape == (batch,), y.shape
    assert jnp.allclose(y, _bf16_reference(x, kparams), atol=2e-3, rtol=2e-3), \
        "mismatch vs bf16 reference (small batch)"
    assert float(jnp.max(jnp.abs(y - _f32_reference(x, params_f32)))) < 5e-2, \
        "mismatch vs f32 reference (small batch)"

    # Case 2: multi-tile batch with tail padding (grid of 2 parallel steps).
    batch2 = 384
    x2 = jax.random.normal(kx2, (batch2, D), dtype=jnp.float32)
    y2 = fwd(x2, kparams)
    jax.block_until_ready(y2)
    assert y2.shape == (batch2,), y2.shape
    assert jnp.allclose(y2, _bf16_reference(x2, kparams), atol=2e-3, rtol=2e-3), \
        "mismatch vs bf16 reference (multi-tile batch)"
    assert float(jnp.max(jnp.abs(y2 - _f32_reference(x2, params_f32)))) < 5e-2, \
        "mismatch vs f32 reference (multi-tile batch)"

    print("KERNEL_OK")
</pallas_src>

<mosaic_0001>
module attributes {stable_mosaic.version = 11 : i64} {
  func.func @_mlp_kernel(%arg0: i32, %arg1: memref<8x64xf32, #tpu.memory_space<vmem>>, %arg2: memref<512x64xbf16, #tpu.memory_space<vmem>>, %arg3: memref<512x1xf32, #tpu.memory_space<vmem>>, %arg4: memref<128x512xbf16, #tpu.memory_space<vmem>>, %arg5: memref<128x1xf32, #tpu.memory_space<vmem>>, %arg6: memref<128x1xf32, #tpu.memory_space<vmem>>, %arg7: memref<1x1xf32, #tpu.memory_space<smem>>, %arg8: memref<1x8xf32, #tpu.memory_space<vmem>>) attributes {dimension_semantics = [#tpu.dimension_semantics<parallel>], iteration_bounds = array<i64: 1>, scalar_prefetch = 0 : i64, scratch_operands = 0 : i64, tpu.core_type = #tpu.core_type<tc>, window_params = [{transform_indices = @transform_0, window_bounds = array<i64: 8, 64>}, {pipeline_mode = #tpu.pipeline_mode<synchronous>, transform_indices = @transform_1, window_bounds = array<i64: 512, 64>}, {pipeline_mode = #tpu.pipeline_mode<synchronous>, transform_indices = @transform_2, window_bounds = array<i64: 512, 1>}, {pipeline_mode = #tpu.pipeline_mode<synchronous>, transform_indices = @transform_3, window_bounds = array<i64: 128, 512>}, {pipeline_mode = #tpu.pipeline_mode<synchronous>, transform_indices = @transform_4, window_bounds = array<i64: 128, 1>}, {pipeline_mode = #tpu.pipeline_mode<synchronous>, transform_indices = @transform_5, window_bounds = array<i64: 128, 1>}, {transform_indices = @transform_6, window_bounds = array<i64: 1, 1>}, {transform_indices = @transform_7, window_bounds = array<i64: 1, 8>}]} {
    %c0 = arith.constant 0 : index
    %c0_0 = arith.constant 0 : index
    %0 = vector.load %arg1[%c0, %c0_0] : memref<8x64xf32, #tpu.memory_space<vmem>>, vector<8x64xf32>
    %1 = arith.truncf %0 : vector<8x64xf32> to vector<8x64xbf16>
    %c0_1 = arith.constant 0 : index
    %c0_2 = arith.constant 0 : index
    %2 = vector.load %arg2[%c0_1, %c0_2] : memref<512x64xbf16, #tpu.memory_space<vmem>>, vector<512x64xbf16>
    %cst = arith.constant dense<0.000000e+00> : vector<512x8xf32>
    %3 = tpu.matmul %2, %1, %cst {dimension_numbers = #tpu.dot_dimension_numbers<[1], [1], [0], [0], [0, 0, 1, 0], [], []>} : vector<512x64xbf16>, vector<8x64xbf16>, vector<512x8xf32> -> vector<512x8xf32>
    %c0_3 = arith.constant 0 : index
    %c0_4 = arith.constant 0 : index
    %4 = vector.load %arg3[%c0_3, %c0_4] : memref<512x1xf32, #tpu.memory_space<vmem>>, vector<512x1xf32>
    %5 = vector.broadcast %4 : vector<512x1xf32> to vector<512x8xf32>
    %6 = arith.addf %3, %5 : vector<512x8xf32>
    %cst_5 = arith.constant 0.000000e+00 : f32
    %7 = vector.broadcast %cst_5 : f32 to vector<512x8xf32>
    %8 = arith.maximumf %6, %7 : vector<512x8xf32>
    %c0_6 = arith.constant 0 : index
    %c0_7 = arith.constant 0 : index
    %9 = vector.load %arg4[%c0_6, %c0_7] : memref<128x512xbf16, #tpu.memory_space<vmem>>, vector<128x512xbf16>
    %10 = arith.truncf %8 : vector<512x8xf32> to vector<512x8xbf16>
    %cst_8 = arith.constant dense<0.000000e+00> : vector<128x8xf32>
    %11 = tpu.matmul %9, %10, %cst_8 {dimension_numbers = #tpu.dot_dimension_numbers<[1], [0], [0], [1], [0, 0, 1, 1], [], []>} : vector<128x512xbf16>, vector<512x8xbf16>, vector<128x8xf32> -> vector<128x8xf32>
    %c0_9 = arith.constant 0 : index
    %c0_10 = arith.constant 0 : index
    %12 = vector.load %arg5[%c0_9, %c0_10] : memref<128x1xf32, #tpu.memory_space<vmem>>, vector<128x1xf32>
    %13 = vector.broadcast %12 : vector<128x1xf32> to vector<128x8xf32>
    %14 = arith.addf %11, %13 : vector<128x8xf32>
    %cst_11 = arith.constant 0.000000e+00 : f32
    %15 = vector.broadcast %cst_11 : f32 to vector<128x8xf32>
    %16 = arith.maximumf %14, %15 : vector<128x8xf32>
    %c0_12 = arith.constant 0 : index
    %c0_13 = arith.constant 0 : index
    %17 = vector.load %arg6[%c0_12, %c0_13] : memref<128x1xf32, #tpu.memory_space<vmem>>, vector<128x1xf32>
    %18 = vector.broadcast %17 : vector<128x1xf32> to vector<128x8xf32>
    %19 = arith.mulf %16, %18 : vector<128x8xf32>
    %cst_14 = arith.constant dense<0.000000e+00> : vector<8xf32>
    %20 = vector.multi_reduction <add>, %19, %cst_14 [0] : vector<128x8xf32> to vector<8xf32>
    %21 = vector.shape_cast %20 : vector<8xf32> to vector<1x8xf32>
    %c0_15 = arith.constant 0 : index
    %c0_16 = arith.constant 0 : index
    %22 = memref.load %arg7[%c0_15, %c0_16] : memref<1x1xf32, #tpu.memory_space<smem>>
    %23 = vector.broadcast %22 : f32 to vector<1x8xf32>
    %24 = arith.addf %21, %23 : vector<1x8xf32>
    %c0_17 = arith.constant 0 : index
    %c0_18 = arith.constant 0 : index
    %25 = vector.load %arg8[%c0_17, %c0_18] : memref<1x8xf32, #tpu.memory_space<vmem>>, vector<1x8xf32>
    tpu.vector_store %arg8[%c0_17, %c0_18], %24 {strides = array<i32>} : memref<1x8xf32, #tpu.memory_space<vmem>>, vector<1x8xf32>,
    return
  }
  func.func @transform_0(%arg0: i32) -> (i32, i32) {
    %c0_i32 = arith.constant 0 : i32
    %c0_i32_0 = arith.constant 0 : i32
    return %arg0, %c0_i32 : i32, i32
  }
  func.func @transform_1(%arg0: i32) -> (i32, i32) {
    %c0_i32 = arith.constant 0 : i32
    %c0_i32_0 = arith.constant 0 : i32
    %c0_i32_1 = arith.constant 0 : i32
    return %c0_i32, %c0_i32_0 : i32, i32
  }
  func.func @transform_2(%arg0: i32) -> (i32, i32) {
    %c0_i32 = arith.constant 0 : i32
    %c0_i32_0 = arith.constant 0 : i32
    %c0_i32_1 = arith.constant 0 : i32
    return %c0_i32, %c0_i32_0 : i32, i32
  }
  func.func @transform_3(%arg0: i32) -> (i32, i32) {
    %c0_i32 = arith.constant 0 : i32
    %c0_i32_0 = arith.constant 0 : i32
    %c0_i32_1 = arith.constant 0 : i32
    return %c0_i32, %c0_i32_0 : i32, i32
  }
  func.func @transform_4(%arg0: i32) -> (i32, i32) {
    %c0_i32 = arith.constant 0 : i32
    %c0_i32_0 = arith.constant 0 : i32
    %c0_i32_1 = arith.constant 0 : i32
    return %c0_i32, %c0_i32_0 : i32, i32
  }
  func.func @transform_5(%arg0: i32) -> (i32, i32) {
    %c0_i32 = arith.constant 0 : i32
    %c0_i32_0 = arith.constant 0 : i32
    %c0_i32_1 = arith.constant 0 : i32
    return %c0_i32, %c0_i32_0 : i32, i32
  }
  func.func @transform_6(%arg0: i32) -> (i32, i32) {
    %c0_i32 = arith.constant 0 : i32
    %c0_i32_0 = arith.constant 0 : i32
    %c0_i32_1 = arith.constant 0 : i32
    return %c0_i32, %c0_i32_0 : i32, i32
  }
  func.func @transform_7(%arg0: i32) -> (i32, i32) {
    %c0_i32 = arith.constant 0 : i32
    %c0_i32_0 = arith.constant 0 : i32
    return %c0_i32, %arg0 : i32, i32
  }
}

</mosaic_0001>

<llo_original>
// kernel: regressor_forward.1
$region0: #{regressor_forward.1}
  #allocation0 [shape = 'u32[]', space=smem, size = 0x4, offset = 0x4, fixed_abs, tag = 'smem constant byte address 0x4 - core index']
  #allocation1 [shape = 'u32[144,128]{1,0:T(1,128)}', space=vmem, size = 0x12000, scoped, tag = 'internal scratch']
  #allocation2 [shape = 'f32[1,1]{1,0:T(1,128)S(6)}', space=smem, size = 0x200, scoped, tag = 'scoped memory for regressor_forward.1']
  %s0 = inlined_call_operand.vmem [shape: f32[8,64], index: 0, kind: input, shape index: {}]
  %s1 = inlined_call_operand.vmem [shape: bf16[512,64], index: 1, kind: input, shape index: {}]
  %s2 = inlined_call_operand.vmem [shape: f32[512,1], index: 2, kind: input, shape index: {}]
  %s3 = inlined_call_operand.vmem [shape: bf16[128,512], index: 3, kind: input, shape index: {}]
  %s4 = inlined_call_operand.vmem [shape: f32[128,1], index: 4, kind: input, shape index: {}]
  %s5 = inlined_call_operand.vmem [shape: f32[128,1], index: 5, kind: input, shape index: {}]
  %s6 = inlined_call_operand.<no memory space> [shape: f32[1,1], index: 6, kind: input, shape index: {}]
  %s7 = inlined_call_operand.hbm [shape: f32[1,8], index: 7, kind: output, shape index: {}]
  %s8 = sld [smem:[#allocation0]]
  $region38: #{regressor_forward.1} parent=0
    _
  %s10 = ssub.s32 1, %s8
  %s11 = scalar_select 0, %s10, %s8
  %12 = sst [smem:[#allocation2]] %s6
  $region1: #{regressor_forward.1} parent=0
    #allocation3 [shape = 'u8[512]{0}', space=vmem, size = 0x400, scoped, tag = 'output window, operand 0, single buffered']
    #allocation4 [shape = 's32[1]{0}', space=sflag, size = 0x4, scoped, tag = 'scoped memory for regressor_forward.1']
    %13 = vsyncpa [#allocation4], 0
    // Predicated region
    $region2: #{regressor_forward.1} parent=1 // pred_check
      _
    $region3: #{regressor_forward.1} parent=1 // pred_check_branch
      %15 = sbr.rel (0) target = $region5
    $region4: #{regressor_forward.1} parent=1 // pred_region
      _
    $region5: #{regressor_forward.1} parent=1 // pred_fallthru
      _
    // Predicated region
    $region6: #{regressor_forward.1} parent=1 // pred_check
      _
    $region7: #{regressor_forward.1} parent=1 // pred_check_branch
      %17 = sbr.rel (0) target = $region9
    $region8: #{regressor_forward.1} parent=1 // pred_region
      _
    $region9: #{regressor_forward.1} parent=1 // pred_fallthru
      _
    // Predicated region
    $region10: #{regressor_forward.1} parent=1 // pred_check
      _
    $region11: #{regressor_forward.1} parent=1 // pred_check_branch
      %19 = sbr.rel (0) target = $region13
    $region12: #{regressor_forward.1} parent=1 // pred_region
      _
    $region13: #{regressor_forward.1} parent=1 // pred_fallthru
      _
    // Predicated region
    $region14: #{regressor_forward.1} parent=1 // pred_check
      _
    $region15: #{regressor_forward.1} parent=1 // pred_check_branch
      %21 = sbr.rel (0) target = $region17
    $region16: #{regressor_forward.1} parent=1 // pred_region
      _
    $region17: #{regressor_forward.1} parent=1 // pred_fallthru
      _
    // Predicated region
    $region18: #{regressor_forward.1} parent=1 // pred_check
      _
    $region19: #{regressor_forward.1} parent=1 // pred_check_branch
      %23 = sbr.rel (0) target = $region21
    $region20: #{regressor_forward.1} parent=1 // pred_region
      _
    $region21: #{regressor_forward.1} parent=1 // pred_fallthru
      _
    // Predicated region
    $region22: #{regressor_forward.1} parent=1 // pred_check
      _
    $region23: #{regressor_forward.1} parent=1 // pred_check_branch
      %25 = sbr.rel (0) target = $region25
    $region24: #{regressor_forward.1} parent=1 // pred_region
      _
    $region25: #{regressor_forward.1} parent=1 // pred_fallthru
      _
    // Predicated region
    $region26: #{regressor_forward.1} parent=1 // pred_check
      _
    $region27: #{regressor_forward.1} parent=1 // pred_check_branch
      %27 = sbr.rel (0) target = $region29
    $region28: #{regressor_forward.1} parent=1 // pred_region
      _
    $region29: #{regressor_forward.1} parent=1 // pred_fallthru
      _
    %v29 = vld [vmem:[%s0] sm:$0xff]
    %v30 = vpack.c.bf16 %v29, %v29
    %v31 = vld [vmem:[%s1] sm:$0xf]
    %v32 = vld [vmem:[%s1 + $0x4] sm:$0xf]
    %v33 = vld [vmem:[%s1 + $0x8] sm:$0xf]
    %v34 = vld [vmem:[%s1 + $0xc] sm:$0xf]
    %v35 = vld [vmem:[%s1 + $0x10] sm:$0xf]
    %v36 = vld [vmem:[%s1 + $0x14] sm:$0xf]
    %v37 = vld [vmem:[%s1 + $0x18] sm:$0xf]
    %v38 = vld [vmem:[%s1 + $0x1c] sm:$0xf]
    %v39 = vld [vmem:[%s1 + $0x20] sm:$0xf]
    %v40 = vld [vmem:[%s1 + $0x24] sm:$0xf]
    %v41 = vld [vmem:[%s1 + $0x28] sm:$0xf]
    %v42 = vld [vmem:[%s1 + $0x2c] sm:$0xf]
    %v43 = vld [vmem:[%s1 + $0x30] sm:$0xf]
    %v44 = vld [vmem:[%s1 + $0x34] sm:$0xf]
    %v45 = vld [vmem:[%s1 + $0x38] sm:$0xf]
    %v46 = vld [vmem:[%s1 + $0x3c] sm:$0xf]
    %v47 = vld [vmem:[%s1 + $0x40] sm:$0xf]
    %v48 = vld [vmem:[%s1 + $0x44] sm:$0xf]
    %v49 = vld [vmem:[%s1 + $0x48] sm:$0xf]
    %v50 = vld [vmem:[%s1 + $0x4c] sm:$0xf]
    %v51 = vld [vmem:[%s1 + $0x50] sm:$0xf]
    %v52 = vld [vmem:[%s1 + $0x54] sm:$0xf]
    %v53 = vld [vmem:[%s1 + $0x58] sm:$0xf]
    %v54 = vld [vmem:[%s1 + $0x5c] sm:$0xf]
    %v55 = vld [vmem:[%s1 + $0x60] sm:$0xf]
    %v56 = vld [vmem:[%s1 + $0x64] sm:$0xf]
    %v57 = vld [vmem:[%s1 + $0x68] sm:$0xf]
    %v58 = vld [vmem:[%s1 + $0x6c] sm:$0xf]
    %v59 = vld [vmem:[%s1 + $0x70] sm:$0xf]
    %v60 = vld [vmem:[%s1 + $0x74] sm:$0xf]
    %v61 = vld [vmem:[%s1 + $0x78] sm:$0xf]
    %v62 = vld [vmem:[%s1 + $0x7c] sm:$0xf]
    %v63 = vld [vmem:[%s1 + $0x80] sm:$0xf]
    %v64 = vld [vmem:[%s1 + $0x84] sm:$0xf]
    %v65 = vld [vmem:[%s1 + $0x88] sm:$0xf]
    %v66 = vld [vmem:[%s1 + $0x8c] sm:$0xf]
    %v67 = vld [vmem:[%s1 + $0x90] sm:$0xf]
    %v68 = vld [vmem:[%s1 + $0x94] sm:$0xf]
    %v69 = vld [vmem:[%s1 + $0x98] sm:$0xf]
    %v70 = vld [vmem:[%s1 + $0x9c] sm:$0xf]
    %v71 = vld [vmem:[%s1 + $0xa0] sm:$0xf]
    %v72 = vld [vmem:[%s1 + $0xa4] sm:$0xf]
    %v73 = vld [vmem:[%s1 + $0xa8] sm:$0xf]
    %v74 = vld [vmem:[%s1 + $0xac] sm:$0xf]
    %v75 = vld [vmem:[%s1 + $0xb0] sm:$0xf]
    %v76 = vld [vmem:[%s1 + $0xb4] sm:$0xf]
    %v77 = vld [vmem:[%s1 + $0xb8] sm:$0xf]
    %v78 = vld [vmem:[%s1 + $0xbc] sm:$0xf]
    %v79 = vld [vmem:[%s1 + $0xc0] sm:$0xf]
    %v80 = vld [vmem:[%s1 + $0xc4] sm:$0xf]
    %v81 = vld [vmem:[%s1 + $0xc8] sm:$0xf]
    %v82 = vld [vmem:[%s1 + $0xcc] sm:$0xf]
    %v83 = vld [vmem:[%s1 + $0xd0] sm:$0xf]
    %v84 = vld [vmem:[%s1 + $0xd4] sm:$0xf]
    %v85 = vld [vmem:[%s1 + $0xd8] sm:$0xf]
    %v86 = vld [vmem:[%s1 + $0xdc] sm:$0xf]
    %v87 = vld [vmem:[%s1 + $0xe0] sm:$0xf]
    %v88 = vld [vmem:[%s1 + $0xe4] sm:$0xf]
    %v89 = vld [vmem:[%s1 + $0xe8] sm:$0xf]
    %v90 = vld [vmem:[%s1 + $0xec] sm:$0xf]
    %v91 = vld [vmem:[%s1 + $0xf0] sm:$0xf]
    %v92 = vld [vmem:[%s1 + $0xf4] sm:$0xf]
    %v93 = vld [vmem:[%s1 + $0xf8] sm:$0xf]
    %v94 = vld [vmem:[%s1 + $0xfc] sm:$0xf]
    %v95 = vld [vmem:[%s2] sm:$0xff]
    %v96 = vld [vmem:[%s2 + $0x8] sm:$0xff]
    %v97 = vld [vmem:[%s2 + $0x10] sm:$0xff]
    %v98 = vld [vmem:[%s2 + $0x18] sm:$0xff]
    %v99 = vld [vmem:[%s2 + $0x20] sm:$0xff]
    %v100 = vld [vmem:[%s2 + $0x28] sm:$0xff]
    %v101 = vld [vmem:[%s2 + $0x30] sm:$0xff]
    %v102 = vld [vmem:[%s2 + $0x38] sm:$0xff]
    %v103 = vld [vmem:[%s2 + $0x40] sm:$0xff]
    %v104 = vld [vmem:[%s2 + $0x48] sm:$0xff]
    %v105 = vld [vmem:[%s2 + $0x50] sm:$0xff]
    %v106 = vld [vmem:[%s2 + $0x58] sm:$0xff]
    %v107 = vld [vmem:[%s2 + $0x60] sm:$0xff]
    %v108 = vld [vmem:[%s2 + $0x68] sm:$0xff]
    %v109 = vld [vmem:[%s2 + $0x70] sm:$0xff]
    %v110 = vld [vmem:[%s2 + $0x78] sm:$0xff]
    %v111 = vld [vmem:[%s2 + $0x80] sm:$0xff]
    %v112 = vld [vmem:[%s2 + $0x88] sm:$0xff]
    %v113 = vld [vmem:[%s2 + $0x90] sm:$0xff]
    %v114 = vld [vmem:[%s2 + $0x98] sm:$0xff]
    %v115 = vld [vmem:[%s2 + $0xa0] sm:$0xff]
    %v116 = vld [vmem:[%s2 + $0xa8] sm:$0xff]
    %v117 = vld [vmem:[%s2 + $0xb0] sm:$0xff]
    %v118 = vld [vmem:[%s2 + $0xb8] sm:$0xff]
    %v119 = vld [vmem:[%s2 + $0xc0] sm:$0xff]
    %v120 = vld [vmem:[%s2 + $0xc8] sm:$0xff]
    %v121 = vld [vmem:[%s2 + $0xd0] sm:$0xff]
    %v122 = vld [vmem:[%s2 + $0xd8] sm:$0xff]
    %v123 = vld [vmem:[%s2 + $0xe0] sm:$0xff]
    %v124 = vld [vmem:[%s2 + $0xe8] sm:$0xff]
    %v125 = vld [vmem:[%s2 + $0xf0] sm:$0xff]
    %v126 = vld [vmem:[%s2 + $0xf8] sm:$0xff]
    %v127 = vld [vmem:[%s2 + $0x100] sm:$0xff]
    %v128 = vld [vmem:[%s2 + $0x108] sm:$0xff]
    %v129 = vld [vmem:[%s2 + $0x110] sm:$0xff]
    %v130 = vld [vmem:[%s2 + $0x118] sm:$0xff]
    %v131 = vld [vmem:[%s2 + $0x120] sm:$0xff]
    %v132 = vld [vmem:[%s2 + $0x128] sm:$0xff]
    %v133 = vld [vmem:[%s2 + $0x130] sm:$0xff]
    %v134 = vld [vmem:[%s2 + $0x138] sm:$0xff]
    %v135 = vld [vmem:[%s2 + $0x140] sm:$0xff]
    %v136 = vld [vmem:[%s2 + $0x148] sm:$0xff]
    %v137 = vld [vmem:[%s2 + $0x150] sm:$0xff]
    %v138 = vld [vmem:[%s2 + $0x158] sm:$0xff]
    %v139 = vld [vmem:[%s2 + $0x160] sm:$0xff]
    %v140 = vld [vmem:[%s2 + $0x168] sm:$0xff]
    %v141 = vld [vmem:[%s2 + $0x170] sm:$0xff]
    %v142 = vld [vmem:[%s2 + $0x178] sm:$0xff]
    %v143 = vld [vmem:[%s2 + $0x180] sm:$0xff]
    %v144 = vld [vmem:[%s2 + $0x188] sm:$0xff]
    %v145 = vld [vmem:[%s2 + $0x190] sm:$0xff]
    %v146 = vld [vmem:[%s2 + $0x198] sm:$0xff]
    %v147 = vld [vmem:[%s2 + $0x1a0] sm:$0xff]
    %v148 = vld [vmem:[%s2 + $0x1a8] sm:$0xff]
    %v149 = vld [vmem:[%s2 + $0x1b0] sm:$0xff]
    %v150 = vld [vmem:[%s2 + $0x1b8] sm:$0xff]
    %v151 = vld [vmem:[%s2 + $0x1c0] sm:$0xff]
    %v152 = vld [vmem:[%s2 + $0x1c8] sm:$0xff]
    %v153 = vld [vmem:[%s2 + $0x1d0] sm:$0xff]
    %v154 = vld [vmem:[%s2 + $0x1d8] sm:$0xff]
    %v155 = vld [vmem:[%s2 + $0x1e0] sm:$0xff]
    %v156 = vld [vmem:[%s2 + $0x1e8] sm:$0xff]
    %v157 = vld [vmem:[%s2 + $0x1f0] sm:$0xff]
    %v158 = vld [vmem:[%s2 + $0x1f8] sm:$0xff]
    %160 = vset.pattern.permute.xlu0 0
    %161 = vperm.xlu0 %160, %v95
    %v162 = vpop.permute.xlu0 %161
    %165 = vset.pattern.permute.xlu0 0
    %166 = vperm.xlu0 %165, %v96
    %v167 = vpop.permute.xlu0 %166
    %170 = vset.pattern.permute.xlu0 0
    %171 = vperm.xlu0 %170, %v97
    %v172 = vpop.permute.xlu0 %171
    %175 = vset.pattern.permute.xlu0 0
    %176 = vperm.xlu0 %175, %v98
    %v177 = vpop.permute.xlu0 %176
    %180 = vset.pattern.permute.xlu0 0
    %181 = vperm.xlu0 %180, %v99
    %v182 = vpop.permute.xlu0 %181
    %185 = vset.pattern.permute.xlu0 0
    %186 = vperm.xlu0 %185, %v100
    %v187 = vpop.permute.xlu0 %186
    %190 = vset.pattern.permute.xlu0 0
    %191 = vperm.xlu0 %190, %v101
    %v192 = vpop.permute.xlu0 %191
    %195 = vset.pattern.permute.xlu0 0
    %196 = vperm.xlu0 %195, %v102
    %v197 = vpop.permute.xlu0 %196
    %200 = vset.pattern.permute.xlu0 0
    %201 = vperm.xlu0 %200, %v103
    %v202 = vpop.permute.xlu0 %201
    %205 = vset.pattern.permute.xlu0 0
    %206 = vperm.xlu0 %205, %v104
    %v207 = vpop.permute.xlu0 %206
    %210 = vset.pattern.permute.xlu0 0
    %211 = vperm.xlu0 %210, %v105
    %v212 = vpop.permute.xlu0 %211
    %215 = vset.pattern.permute.xlu0 0
    %216 = vperm.xlu0 %215, %v106
    %v217 = vpop.permute.xlu0 %216
    %220 = vset.pattern.permute.xlu0 0
    %221 = vperm.xlu0 %220, %v107
    %v222 = vpop.permute.xlu0 %221
    %225 = vset.pattern.permute.xlu0 0
    %226 = vperm.xlu0 %225, %v108
    %v227 = vpop.permute.xlu0 %226
    %230 = vset.pattern.permute.xlu0 0
    %231 = vperm.xlu0 %230, %v109
    %v232 = vpop.permute.xlu0 %231
    %235 = vset.pattern.permute.xlu0 0
    %236 = vperm.xlu0 %235, %v110
    %v237 = vpop.permute.xlu0 %236
    %240 = vset.pattern.permute.xlu0 0
    %241 = vperm.xlu0 %240, %v111
    %v242 = vpop.permute.xlu0 %241
    %245 = vset.pattern.permute.xlu0 0
    %246 = vperm.xlu0 %245, %v112
    %v247 = vpop.permute.xlu0 %246
    %250 = vset.pattern.permute.xlu0 0
    %251 = vperm.xlu0 %250, %v113
    %v252 = vpop.permute.xlu0 %251
    %255 = vset.pattern.permute.xlu0 0
    %256 = vperm.xlu0 %255, %v114
    %v257 = vpop.permute.xlu0 %256
    %260 = vset.pattern.permute.xlu0 0
    %261 = vperm.xlu0 %260, %v115
    %v262 = vpop.permute.xlu0 %261
    %265 = vset.pattern.permute.xlu0 0
    %266 = vperm.xlu0 %265, %v116
    %v267 = vpop.permute.xlu0 %266
    %270 = vset.pattern.permute.xlu0 0
    %271 = vperm.xlu0 %270, %v117
    %v272 = vpop.permute.xlu0 %271
    %275 = vset.pattern.permute.xlu0 0
    %276 = vperm.xlu0 %275, %v118
    %v277 = vpop.permute.xlu0 %276
    %280 = vset.pattern.permute.xlu0 0
    %281 = vperm.xlu0 %280, %v119
    %v282 = vpop.permute.xlu0 %281
    %285 = vset.pattern.permute.xlu0 0
    %286 = vperm.xlu0 %285, %v120
    %v287 = vpop.permute.xlu0 %286
    %290 = vset.pattern.permute.xlu0 0
    %291 = vperm.xlu0 %290, %v121
    %v292 = vpop.permute.xlu0 %291
    %295 = vset.pattern.permute.xlu0 0
    %296 = vperm.xlu0 %295, %v122
    %v297 = vpop.permute.xlu0 %296
    %300 = vset.pattern.permute.xlu0 0
    %301 = vperm.xlu0 %300, %v123
    %v302 = vpop.permute.xlu0 %301
    %305 = vset.pattern.permute.xlu0 0
    %306 = vperm.xlu0 %305, %v124
    %v307 = vpop.permute.xlu0 %306
    %310 = vset.pattern.permute.xlu0 0
    %311 = vperm.xlu0 %310, %v125
    %v312 = vpop.permute.xlu0 %311
    %315 = vset.pattern.permute.xlu0 0
    %316 = vperm.xlu0 %315, %v126
    %v317 = vpop.permute.xlu0 %316
    %320 = vset.pattern.permute.xlu0 0
    %321 = vperm.xlu0 %320, %v127
    %v322 = vpop.permute.xlu0 %321
    %325 = vset.pattern.permute.xlu0 0
    %326 = vperm.xlu0 %325, %v128
    %v327 = vpop.permute.xlu0 %326
    %330 = vset.pattern.permute.xlu0 0
    %331 = vperm.xlu0 %330, %v129
    %v332 = vpop.permute.xlu0 %331
    %335 = vset.pattern.permute.xlu0 0
    %336 = vperm.xlu0 %335, %v130
    %v337 = vpop.permute.xlu0 %336
    %340 = vset.pattern.permute.xlu0 0
    %341 = vperm.xlu0 %340, %v131
    %v342 = vpop.permute.xlu0 %341
    %345 = vset.pattern.permute.xlu0 0
    %346 = vperm.xlu0 %345, %v132
    %v347 = vpop.permute.xlu0 %346
    %350 = vset.pattern.permute.xlu0 0
    %351 = vperm.xlu0 %350, %v133
    %v352 = vpop.permute.xlu0 %351
    %355 = vset.pattern.permute.xlu0 0
    %356 = vperm.xlu0 %355, %v134
    %v357 = vpop.permute.xlu0 %356
    %360 = vset.pattern.permute.xlu0 0
    %361 = vperm.xlu0 %360, %v135
    %v362 = vpop.permute.xlu0 %361
    %365 = vset.pattern.permute.xlu0 0
    %366 = vperm.xlu0 %365, %v136
    %v367 = vpop.permute.xlu0 %366
    %370 = vset.pattern.permute.xlu0 0
    %371 = vperm.xlu0 %370, %v137
    %v372 = vpop.permute.xlu0 %371
    %375 = vset.pattern.permute.xlu0 0
    %376 = vperm.xlu0 %375, %v138
    %v377 = vpop.permute.xlu0 %376
    %380 = vset.pattern.permute.xlu0 0
    %381 = vperm.xlu0 %380, %v139
    %v382 = vpop.permute.xlu0 %381
    %385 = vset.pattern.permute.xlu0 0
    %386 = vperm.xlu0 %385, %v140
    %v387 = vpop.permute.xlu0 %386
    %390 = vset.pattern.permute.xlu0 0
    %391 = vperm.xlu0 %390, %v141
    %v392 = vpop.permute.xlu0 %391
    %395 = vset.pattern.permute.xlu0 0
    %396 = vperm.xlu0 %395, %v142
    %v397 = vpop.permute.xlu0 %396
    %400 = vset.pattern.permute.xlu0 0
    %401 = vperm.xlu0 %400, %v143
    %v402 = vpop.permute.xlu0 %401
    %405 = vset.pattern.permute.xlu0 0
    %406 = vperm.xlu0 %405, %v144
    %v407 = vpop.permute.xlu0 %406
    %410 = vset.pattern.permute.xlu0 0
    %411 = vperm.xlu0 %410, %v145
    %v412 = vpop.permute.xlu0 %411
    %415 = vset.pattern.permute.xlu0 0
    %416 = vperm.xlu0 %415, %v146
    %v417 = vpop.permute.xlu0 %416
    %420 = vset.pattern.permute.xlu0 0
    %421 = vperm.xlu0 %420, %v147
    %v422 = vpop.permute.xlu0 %421
    %425 = vset.pattern.permute.xlu0 0
    %426 = vperm.xlu0 %425, %v148
    %v427 = vpop.permute.xlu0 %426
    %430 = vset.pattern.permute.xlu0 0
    %431 = vperm.xlu0 %430, %v149
    %v432 = vpop.permute.xlu0 %431
    %435 = vset.pattern.permute.xlu0 0
    %436 = vperm.xlu0 %435, %v150
    %v437 = vpop.permute.xlu0 %436
    %440 = vset.pattern.permute.xlu0 0
    %441 = vperm.xlu0 %440, %v151
    %v442 = vpop.permute.xlu0 %441
    %445 = vset.pattern.permute.xlu0 0
    %446 = vperm.xlu0 %445, %v152
    %v447 = vpop.permute.xlu0 %446
    %450 = vset.pattern.permute.xlu0 0
    %451 = vperm.xlu0 %450, %v153
    %v452 = vpop.permute.xlu0 %451
    %455 = vset.pattern.permute.xlu0 0
    %456 = vperm.xlu0 %455, %v154
    %v457 = vpop.permute.xlu0 %456
    %460 = vset.pattern.permute.xlu0 0
    %461 = vperm.xlu0 %460, %v155
    %v462 = vpop.permute.xlu0 %461
    %465 = vset.pattern.permute.xlu0 0
    %466 = vperm.xlu0 %465, %v156
    %v467 = vpop.permute.xlu0 %466
    %470 = vset.pattern.permute.xlu0 0
    %471 = vperm.xlu0 %470, %v157
    %v472 = vpop.permute.xlu0 %471
    %475 = vset.pattern.permute.xlu0 0
    %476 = vperm.xlu0 %475, %v158
    %v477 = vpop.permute.xlu0 %476
    %v543 = vunpack.c.l.b16 %v31
    %v544 = vunpack.c.l.b16 %v32
    %v545 = vunpack.c.l.b16 %v33
    %v546 = vunpack.c.l.b16 %v34
    %v547 = vunpack.c.l.b16 %v35
    %v548 = vunpack.c.l.b16 %v36
    %v549 = vunpack.c.l.b16 %v37
    %v550 = vunpack.c.l.b16 %v38
    %v551 = vunpack.c.l.b16 %v39
    %v552 = vunpack.c.l.b16 %v40
    %v553 = vunpack.c.l.b16 %v41
    %v554 = vunpack.c.l.b16 %v42
    %v555 = vunpack.c.l.b16 %v43
    %v556 = vunpack.c.l.b16 %v44
    %v557 = vunpack.c.l.b16 %v45
    %v558 = vunpack.c.l.b16 %v46
    %v559 = vunpack.c.l.b16 %v47
    %v560 = vunpack.c.l.b16 %v48
    %v561 = vunpack.c.l.b16 %v49
    %v562 = vunpack.c.l.b16 %v50
    %v563 = vunpack.c.l.b16 %v51
    %v564 = vunpack.c.l.b16 %v52
    %v565 = vunpack.c.l.b16 %v53
    %v566 = vunpack.c.l.b16 %v54
    %v567 = vunpack.c.l.b16 %v55
    %v568 = vunpack.c.l.b16 %v56
    %v569 = vunpack.c.l.b16 %v57
    %v570 = vunpack.c.l.b16 %v58
    %v571 = vunpack.c.l.b16 %v59
    %v572 = vunpack.c.l.b16 %v60
    %v573 = vunpack.c.l.b16 %v61
    %v574 = vunpack.c.l.b16 %v62
    %v575 = vunpack.c.l.b16 %v63
    %v576 = vunpack.c.l.b16 %v64
    %v577 = vunpack.c.l.b16 %v65
    %v578 = vunpack.c.l.b16 %v66
    %v579 = vunpack.c.l.b16 %v67
    %v580 = vunpack.c.l.b16 %v68
    %v581 = vunpack.c.l.b16 %v69
    %v582 = vunpack.c.l.b16 %v70
    %v583 = vunpack.c.l.b16 %v71
    %v584 = vunpack.c.l.b16 %v72
    %v585 = vunpack.c.l.b16 %v73
    %v586 = vunpack.c.l.b16 %v74
    %v587 = vunpack.c.l.b16 %v75
    %v588 = vunpack.c.l.b16 %v76
    %v589 = vunpack.c.l.b16 %v77
    %v590 = vunpack.c.l.b16 %v78
    %v591 = vunpack.c.l.b16 %v79
    %v592 = vunpack.c.l.b16 %v80
    %v593 = vunpack.c.l.b16 %v81
    %v594 = vunpack.c.l.b16 %v82
    %v595 = vunpack.c.l.b16 %v83
    %v596 = vunpack.c.l.b16 %v84
    %v597 = vunpack.c.l.b16 %v85
    %v598 = vunpack.c.l.b16 %v86
    %v599 = vunpack.c.l.b16 %v87
    %v600 = vunpack.c.l.b16 %v88
    %v601 = vunpack.c.l.b16 %v89
    %v602 = vunpack.c.l.b16 %v90
    %v603 = vunpack.c.l.b16 %v91
    %v604 = vunpack.c.l.b16 %v92
    %v605 = vunpack.c.l.b16 %v93
    %v606 = vunpack.c.l.b16 %v94
    %v607 = vpack.c.b16 %v544, %v543
    %v608 = vpack.c.b16 %v546, %v545
    %v609 = vpack.c.b16 %v548, %v547
    %v610 = vpack.c.b16 %v550, %v549
    %v611 = vpack.c.b16 %v552, %v551
    %v612 = vpack.c.b16 %v554, %v553
    %v613 = vpack.c.b16 %v556, %v555
    %v614 = vpack.c.b16 %v558, %v557
    %v615 = vpack.c.b16 %v560, %v559
    %v616 = vpack.c.b16 %v562, %v561
    %v617 = vpack.c.b16 %v564, %v563
    %v618 = vpack.c.b16 %v566, %v565
    %v619 = vpack.c.b16 %v568, %v567
    %v620 = vpack.c.b16 %v570, %v569
    %v621 = vpack.c.b16 %v572, %v571
    %v622 = vpack.c.b16 %v574, %v573
    %v623 = vpack.c.b16 %v576, %v575
    %v624 = vpack.c.b16 %v578, %v577
    %v625 = vpack.c.b16 %v580, %v579
    %v626 = vpack.c.b16 %v582, %v581
    %v627 = vpack.c.b16 %v584, %v583
    %v628 = vpack.c.b16 %v586, %v585
    %v629 = vpack.c.b16 %v588, %v587
    %v630 = vpack.c.b16 %v590, %v589
    %v631 = vpack.c.b16 %v592, %v591
    %v632 = vpack.c.b16 %v594, %v593
    %v633 = vpack.c.b16 %v596, %v595
    %v634 = vpack.c.b16 %v598, %v597
    %v635 = vpack.c.b16 %v600, %v599
    %v636 = vpack.c.b16 %v602, %v601
    %v637 = vpack.c.b16 %v604, %v603
    %v638 = vpack.c.b16 %v606, %v605
    %vm639 = vcmask 523264
    %v641 = vsel %vm639, %v607, 0
    %v644 = vsel %vm639, %v608, 0
    %v647 = vsel %vm639, %v609, 0
    %v650 = vsel %vm639, %v610, 0
    %v653 = vsel %vm639, %v611, 0
    %v656 = vsel %vm639, %v612, 0
    %v659 = vsel %vm639, %v613, 0
    %v662 = vsel %vm639, %v614, 0
    %v665 = vsel %vm639, %v615, 0
    %v668 = vsel %vm639, %v616, 0
    %v671 = vsel %vm639, %v617, 0
    %v674 = vsel %vm639, %v618, 0
    %v677 = vsel %vm639, %v619, 0
    %v680 = vsel %vm639, %v620, 0
    %v683 = vsel %vm639, %v621, 0
    %v686 = vsel %vm639, %v622, 0
    %v689 = vsel %vm639, %v623, 0
    %v692 = vsel %vm639, %v624, 0
    %v695 = vsel %vm639, %v625, 0
    %v698 = vsel %vm639, %v626, 0
    %v701 = vsel %vm639, %v627, 0
    %v704 = vsel %vm639, %v628, 0
    %v707 = vsel %vm639, %v629, 0
    %v710 = vsel %vm639, %v630, 0
    %v713 = vsel %vm639, %v631, 0
    %v716 = vsel %vm639, %v632, 0
    %v719 = vsel %vm639, %v633, 0
    %v722 = vsel %vm639, %v634, 0
    %v725 = vsel %vm639, %v635, 0
    %v728 = vsel %vm639, %v636, 0
    %v731 = vsel %vm639, %v637, 0
    %v734 = vsel %vm639, %v638, 0
    %v737 = vsel %vm639, %v30, 0
    %739 = vmatprep.subr.bf16.mxu0 0
    %740 = vmatpush1.bf16.xpose.msra.mxu0 %v737
    %741 = vmatprep.subr.bf16.mxu0 0
    %742 = vmatpush1.bf16.xpose.msra.mxu0 0
    %743 = vmatprep.subr.bf16.mxu0 0
    %744 = vmatpush1.bf16.xpose.msra.mxu0 0
    %745 = vmatprep.subr.bf16.mxu0 0
    %746 = vmatpush1.bf16.xpose.msra.mxu0 0
    %747 = vmatprep.subr.bf16.mxu0 0
    %748 = vmatpush1.bf16.xpose.msra.mxu0 0
    %749 = vmatprep.subr.bf16.mxu0 0
    %750 = vmatpush1.bf16.xpose.msra.mxu0 0
    %751 = vmatprep.subr.bf16.mxu0 0
    %752 = vmatpush1.bf16.xpose.msra.mxu0 0
    %753 = vmatprep.subr.bf16.mxu0 0
    %754 = vmatpush1.bf16.xpose.msra.mxu0 0
    %755 = vmatprep.subr.bf16.mxu0 0
    %756 = vmatpush1.bf16.xpose.msra.mxu0 0
    %757 = vmatprep.subr.bf16.mxu0 0
    %758 = vmatpush1.bf16.xpose.msra.mxu0 0
    %759 = vmatprep.subr.bf16.mxu0 0
    %760 = vmatpush1.bf16.xpose.msra.mxu0 0
    %761 = vmatprep.subr.bf16.mxu0 0
    %762 = vmatpush1.bf16.xpose.msra.mxu0 0
    %763 = vmatprep.subr.bf16.mxu0 0
    %764 = vmatpush1.bf16.xpose.msra.mxu0 0
    %765 = vmatprep.subr.bf16.mxu0 0
    %766 = vmatpush1.bf16.xpose.msra.mxu0 0
    %767 = vmatprep.subr.bf16.mxu0 0
    %768 = vmatpush1.bf16.xpose.msra.mxu0 0
    %769 = vmatprep.subr.bf16.mxu0 0
    %770 = vmatpush1.bf16.xpose.msra.mxu0 0
    %771 = vmatprep.mubr.bf16.mxu0 0
    %772 = vmatmul.mubr.bf16.gmra.mrb[0].mxu0 %v641
    %v773 = vpop.f32.mrb[0].mxu0
    %v774 = vadd.f32 %v162, %v773
    %v775 = vpop.f32.mrb[0].mxu0
    %v776 = vpop.f32.mrb[0].mxu0
    %v777 = vadd.f32 %v167, %v776
    %v778 = vpop.f32.mrb[0].mxu0
    %779 = vmatprep.mubr.bf16.mxu0 0
    %780 = vmatmul.mubr.bf16.gmra.mrb[0].mxu0 %v644
    %v781 = vpop.f32.mrb[0].mxu0
    %v782 = vadd.f32 %v172, %v781
    %v783 = vpop.f32.mrb[0].mxu0
    %v784 = vpop.f32.mrb[0].mxu0
    %v785 = vadd.f32 %v177, %v784
    %v786 = vpop.f32.mrb[0].mxu0
    %787 = vmatprep.mubr.bf16.mxu0 0
    %788 = vmatmul.mubr.bf16.gmra.mrb[0].mxu0 %v647
    %v789 = vpop.f32.mrb[0].mxu0
    %v790 = vadd.f32 %v182, %v789
    %v791 = vpop.f32.mrb[0].mxu0
    %v792 = vpop.f32.mrb[0].mxu0
    %v793 = vadd.f32 %v187, %v792
    %v794 = vpop.f32.mrb[0].mxu0
    %795 = vmatprep.mubr.bf16.mxu0 0
    %796 = vmatmul.mubr.bf16.gmra.mrb[0].mxu0 %v650
    %v797 = vpop.f32.mrb[0].mxu0
    %v798 = vadd.f32 %v192, %v797
    %v799 = vpop.f32.mrb[0].mxu0
    %v800 = vpop.f32.mrb[0].mxu0
    %v801 = vadd.f32 %v197, %v800
    %v802 = vpop.f32.mrb[0].mxu0
    %803 = vmatprep.mubr.bf16.mxu0 0
    %804 = vmatmul.mubr.bf16.gmra.mrb[0].mxu0 %v653
    %v805 = vpop.f32.mrb[0].mxu0
    %v806 = vadd.f32 %v202, %v805
    %v807 = vpop.f32.mrb[0].mxu0
    %v808 = vpop.f32.mrb[0].mxu0
    %v809 = vadd.f32 %v207, %v808
    %v810 = vpop.f32.mrb[0].mxu0
    %811 = vmatprep.mubr.bf16.mxu0 0
    %812 = vmatmul.mubr.bf16.gmra.mrb[0].mxu0 %v656
    %v813 = vpop.f32.mrb[0].mxu0
    %v814 = vadd.f32 %v212, %v813
    %v815 = vpop.f32.mrb[0].mxu0
    %v816 = vpop.f32.mrb[0].mxu0
    %v817 = vadd.f32 %v217, %v816
    %v818 = vpop.f32.mrb[0].mxu0
    %819 = vmatprep.mubr.bf16.mxu0 0
    %820 = vmatmul.mubr.bf16.gmra.mrb[0].mxu0 %v659
    %v821 = vpop.f32.mrb[0].mxu0
    %v822 = vadd.f32 %v222, %v821
    %v823 = vpop.f32.mrb[0].mxu0
    %v824 = vpop.f32.mrb[0].mxu0
    %v825 = vadd.f32 %v227, %v824
    %v826 = vpop.f32.mrb[0].mxu0
    %827 = vmatprep.mubr.bf16.mxu0 0
    %828 = vmatmul.mubr.bf16.gmra.mrb[0].mxu0 %v662
    %v829 = vpop.f32.mrb[0].mxu0
    %v830 = vadd.f32 %v232, %v829
    %v831 = vpop.f32.mrb[0].mxu0
    %v832 = vpop.f32.mrb[0].mxu0
    %v833 = vadd.f32 %v237, %v832
    %v834 = vpop.f32.mrb[0].mxu0
    %835 = vmatprep.mubr.bf16.mxu0 0
    %836 = vmatmul.mubr.bf16.gmra.mrb[0].mxu0 %v665
    %v837 = vpop.f32.mrb[0].mxu0
    %v838 = vadd.f32 %v242, %v837
    %v839 = vpop.f32.mrb[0].mxu0
    %v840 = vpop.f32.mrb[0].mxu0
    %v841 = vadd.f32 %v247, %v840
    %v842 = vpop.f32.mrb[0].mxu0
    %843 = vmatprep.mubr.bf16.mxu0 0
    %844 = vmatmul.mubr.bf16.gmra.mrb[0].mxu0 %v668
    %v845 = vpop.f32.mrb[0].mxu0
    %v846 = vadd.f32 %v252, %v845
    %v847 = vpop.f32.mrb[0].mxu0
    %v848 = vpop.f32.mrb[0].mxu0
    %v849 = vadd.f32 %v257, %v848
    %v850 = vpop.f32.mrb[0].mxu0
    %851 = vmatprep.mubr.bf16.mxu0 0
    %852 = vmatmul.mubr.bf16.gmra.mrb[0].mxu0 %v671
    %v853 = vpop.f32.mrb[0].mxu0
    %v854 = vadd.f32 %v262, %v853
    %v855 = vpop.f32.mrb[0].mxu0
    %v856 = vpop.f32.mrb[0].mxu0
    %v857 = vadd.f32 %v267, %v856
    %v858 = vpop.f32.mrb[0].mxu0
    %859 = vmatprep.mubr.bf16.mxu0 0
    %860 = vmatmul.mubr.bf16.gmra.mrb[0].mxu0 %v674
    %v861 = vpop.f32.mrb[0].mxu0
    %v862 = vadd.f32 %v272, %v861
    %v863 = vpop.f32.mrb[0].mxu0
    %v864 = vpop.f32.mrb[0].mxu0
    %v865 = vadd.f32 %v277, %v864
    %v866 = vpop.f32.mrb[0].mxu0
    %867 = vmatprep.mubr.bf16.mxu0 0
    %868 = vmatmul.mubr.bf16.gmra.mrb[0].mxu0 %v677
    %v869 = vpop.f32.mrb[0].mxu0
    %v870 = vadd.f32 %v282, %v869
    %v871 = vpop.f32.mrb[0].mxu0
    %v872 = vpop.f32.mrb[0].mxu0
    %v873 = vadd.f32 %v287, %v872
    %v874 = vpop.f32.mrb[0].mxu0
    %875 = vmatprep.mubr.bf16.mxu0 0
    %876 = vmatmul.mubr.bf16.gmra.mrb[0].mxu0 %v680
    %v877 = vpop.f32.mrb[0].mxu0
    %v878 = vadd.f32 %v292, %v877
    %v879 = vpop.f32.mrb[0].mxu0
    %v880 = vpop.f32.mrb[0].mxu0
    %v881 = vadd.f32 %v297, %v880
    %v882 = vpop.f32.mrb[0].mxu0
    %883 = vmatprep.mubr.bf16.mxu0 0
    %884 = vmatmul.mubr.bf16.gmra.mrb[0].mxu0 %v683
    %v885 = vpop.f32.mrb[0].mxu0
    %v886 = vadd.f32 %v302, %v885
    %v887 = vpop.f32.mrb[0].mxu0
    %v888 = vpop.f32.mrb[0].mxu0
    %v889 = vadd.f32 %v307, %v888
    %v890 = vpop.f32.mrb[0].mxu0
    %891 = vmatprep.mubr.bf16.mxu0 0
    %892 = vmatmul.mubr.bf16.gmra.mrb[0].mxu0 %v686
    %v893 = vpop.f32.mrb[0].mxu0
    %v894 = vadd.f32 %v312, %v893
    %v895 = vpop.f32.mrb[0].mxu0
    %v896 = vpop.f32.mrb[0].mxu0
    %v897 = vadd.f32 %v317, %v896
    %v898 = vpop.f32.mrb[0].mxu0
    %899 = vmatprep.mubr.bf16.mxu0 0
    %900 = vmatmul.mubr.bf16.gmra.mrb[0].mxu0 %v689
    %v901 = vpop.f32.mrb[0].mxu0
    %v902 = vadd.f32 %v322, %v901
    %v903 = vpop.f32.mrb[0].mxu0
    %v904 = vpop.f32.mrb[0].mxu0
    %v905 = vadd.f32 %v327, %v904
    %v906 = vpop.f32.mrb[0].mxu0
    %907 = vmatprep.mubr.bf16.mxu0 0
    %908 = vmatmul.mubr.bf16.gmra.mrb[0].mxu0 %v692
    %v909 = vpop.f32.mrb[0].mxu0
    %v910 = vadd.f32 %v332, %v909
    %v911 = vpop.f32.mrb[0].mxu0
    %v912 = vpop.f32.mrb[0].mxu0
    %v913 = vadd.f32 %v337, %v912
    %v914 = vpop.f32.mrb[0].mxu0
    %915 = vmatprep.mubr.bf16.mxu0 0
    %916 = vmatmul.mubr.bf16.gmra.mrb[0].mxu0 %v695
    %v917 = vpop.f32.mrb[0].mxu0
    %v918 = vadd.f32 %v342, %v917
    %v919 = vpop.f32.mrb[0].mxu0
    %v920 = vpop.f32.mrb[0].mxu0
    %v921 = vadd.f32 %v347, %v920
    %v922 = vpop.f32.mrb[0].mxu0
    %923 = vmatprep.mubr.bf16.mxu0 0
    %924 = vmatmul.mubr.bf16.gmra.mrb[0].mxu0 %v698
    %v925 = vpop.f32.mrb[0].mxu0
    %v926 = vadd.f32 %v352, %v925
    %v927 = vpop.f32.mrb[0].mxu0
    %v928 = vpop.f32.mrb[0].mxu0
    %v929 = vadd.f32 %v357, %v928
    %v930 = vpop.f32.mrb[0].mxu0
    %931 = vmatprep.mubr.bf16.mxu0 0
    %932 = vmatmul.mubr.bf16.gmra.mrb[0].mxu0 %v701
    %v933 = vpop.f32.mrb[0].mxu0
    %v934 = vadd.f32 %v362, %v933
    %v935 = vpop.f32.mrb[0].mxu0
    %v936 = vpop.f32.mrb[0].mxu0
    %v937 = vadd.f32 %v367, %v936
    %v938 = vpop.f32.mrb[0].mxu0
    %939 = vmatprep.mubr.bf16.mxu0 0
    %940 = vmatmul.mubr.bf16.gmra.mrb[0].mxu0 %v704
    %v941 = vpop.f32.mrb[0].mxu0
    %v942 = vadd.f32 %v372, %v941
    %v943 = vpop.f32.mrb[0].mxu0
    %v944 = vpop.f32.mrb[0].mxu0
    %v945 = vadd.f32 %v377, %v944
    %v946 = vpop.f32.mrb[0].mxu0
    %947 = vmatprep.mubr.bf16.mxu0 0
    %948 = vmatmul.mubr.bf16.gmra.mrb[0].mxu0 %v707
    %v949 = vpop.f32.mrb[0].mxu0
    %v950 = vadd.f32 %v382, %v949
    %v951 = vpop.f32.mrb[0].mxu0
    %v952 = vpop.f32.mrb[0].mxu0
    %v953 = vadd.f32 %v387, %v952
    %v954 = vpop.f32.mrb[0].mxu0
    %955 = vmatprep.mubr.bf16.mxu0 0
    %956 = vmatmul.mubr.bf16.gmra.mrb[0].mxu0 %v710
    %v957 = vpop.f32.mrb[0].mxu0
    %v958 = vadd.f32 %v392, %v957
    %v959 = vpop.f32.mrb[0].mxu0
    %v960 = vpop.f32.mrb[0].mxu0
    %v961 = vadd.f32 %v397, %v960
    %v962 = vpop.f32.mrb[0].mxu0
    %963 = vmatprep.mubr.bf16.mxu0 0
    %964 = vmatmul.mubr.bf16.gmra.mrb[0].mxu0 %v713
    %v965 = vpop.f32.mrb[0].mxu0
    %v966 = vadd.f32 %v402, %v965
    %v967 = vpop.f32.mrb[0].mxu0
    %v968 = vpop.f32.mrb[0].mxu0
    %v969 = vadd.f32 %v407, %v968
    %v970 = vpop.f32.mrb[0].mxu0
    %971 = vmatprep.mubr.bf16.mxu0 0
    %972 = vmatmul.mubr.bf16.gmra.mrb[0].mxu0 %v716
    %v973 = vpop.f32.mrb[0].mxu0
    %v974 = vadd.f32 %v412, %v973
    %v975 = vpop.f32.mrb[0].mxu0
    %v976 = vpop.f32.mrb[0].mxu0
    %v977 = vadd.f32 %v417, %v976
    %v978 = vpop.f32.mrb[0].mxu0
    %979 = vmatprep.mubr.bf16.mxu0 0
    %980 = vmatmul.mubr.bf16.gmra.mrb[0].mxu0 %v719
    %v981 = vpop.f32.mrb[0].mxu0
    %v982 = vadd.f32 %v422, %v981
    %v983 = vpop.f32.mrb[0].mxu0
    %v984 = vpop.f32.mrb[0].mxu0
    %v985 = vadd.f32 %v427, %v984
    %v986 = vpop.f32.mrb[0].mxu0
    %987 = vmatprep.mubr.bf16.mxu0 0
    %988 = vmatmul.mubr.bf16.gmra.mrb[0].mxu0 %v722
    %v989 = vpop.f32.mrb[0].mxu0
    %v990 = vadd.f32 %v432, %v989
    %v991 = vpop.f32.mrb[0].mxu0
    %v992 = vpop.f32.mrb[0].mxu0
    %v993 = vadd.f32 %v437, %v992
    %v994 = vpop.f32.mrb[0].mxu0
    %995 = vmatprep.mubr.bf16.mxu0 0
    %996 = vmatmul.mubr.bf16.gmra.mrb[0].mxu0 %v725
    %v997 = vpop.f32.mrb[0].mxu0
    %v998 = vadd.f32 %v442, %v997
    %v999 = vpop.f32.mrb[0].mxu0
    %v1000 = vpop.f32.mrb[0].mxu0
    %v1001 = vadd.f32 %v447, %v1000
    %v1002 = vpop.f32.mrb[0].mxu0
    %1003 = vmatprep.mubr.bf16.mxu0 0
    %1004 = vmatmul.mubr.bf16.gmra.mrb[0].mxu0 %v728
    %v1005 = vpop.f32.mrb[0].mxu0
    %v1006 = vadd.f32 %v452, %v1005
    %v1007 = vpop.f32.mrb[0].mxu0
    %v1008 = vpop.f32.mrb[0].mxu0
    %v1009 = vadd.f32 %v457, %v1008
    %v1010 = vpop.f32.mrb[0].mxu0
    %1011 = vmatprep.mubr.bf16.mxu0 0
    %1012 = vmatmul.mubr.bf16.gmra.mrb[0].mxu0 %v731
    %v1013 = vpop.f32.mrb[0].mxu0
    %v1014 = vadd.f32 %v462, %v1013
    %v1015 = vpop.f32.mrb[0].mxu0
    %v1016 = vpop.f32.mrb[0].mxu0
    %v1017 = vadd.f32 %v467, %v1016
    %v1018 = vpop.f32.mrb[0].mxu0
    %1019 = vmatprep.mubr.bf16.mxu0 0
    %1020 = vmatmul.mubr.bf16.gmra.mrb[0].mxu0 %v734
    %v1021 = vpop.f32.mrb[0].mxu0
    %v1022 = vadd.f32 %v472, %v1021
    %v1023 = vpop.f32.mrb[0].mxu0
    %v1024 = vpop.f32.mrb[0].mxu0
    %v1025 = vadd.f32 %v477, %v1024
    %v1026 = vpop.f32.mrb[0].mxu0
    %1027 = vdwg.mxu0
    %v1028 = vmax.f32 %v774, 0.0
    %v1029 = vmax.f32 %v777, 0.0
    %v1030 = vmax.f32 %v782, 0.0
    %v1031 = vmax.f32 %v785, 0.0
    %v1032 = vmax.f32 %v790, 0.0
    %v1033 = vmax.f32 %v793, 0.0
    %v1034 = vmax.f32 %v798, 0.0
    %v1035 = vmax.f32 %v801, 0.0
    %v1036 = vmax.f32 %v806, 0.0
    %v1037 = vmax.f32 %v809, 0.0
    %v1038 = vmax.f32 %v814, 0.0
    %v1039 = vmax.f32 %v817, 0.0
    %v1040 = vmax.f32 %v822, 0.0
    %v1041 = vmax.f32 %v825, 0.0
    %v1042 = vmax.f32 %v830, 0.0
    %v1043 = vmax.f32 %v833, 0.0
    %v1044 = vmax.f32 %v838, 0.0
    %v1045 = vmax.f32 %v841, 0.0
    %v1046 = vmax.f32 %v846, 0.0
    %v1047 = vmax.f32 %v849, 0.0
    %v1048 = vmax.f32 %v854, 0.0
    %v1049 = vmax.f32 %v857, 0.0
    %v1050 = vmax.f32 %v862, 0.0
    %v1051 = vmax.f32 %v865, 0.0
    %v1052 = vmax.f32 %v870, 0.0
    %v1053 = vmax.f32 %v873, 0.0
    %v1054 = vmax.f32 %v878, 0.0
    %v1055 = vmax.f32 %v881, 0.0
    %v1056 = vmax.f32 %v886, 0.0
    %v1057 = vmax.f32 %v889, 0.0
    %v1058 = vmax.f32 %v894, 0.0
    %v1059 = vmax.f32 %v897, 0.0
    %v1060 = vmax.f32 %v902, 0.0
    %v1061 = vmax.f32 %v905, 0.0
    %v1062 = vmax.f32 %v910, 0.0
    %v1063 = vmax.f32 %v913, 0.0
    %v1064 = vmax.f32 %v918, 0.0
    %v1065 = vmax.f32 %v921, 0.0
    %v1066 = vmax.f32 %v926, 0.0
    %v1067 = vmax.f32 %v929, 0.0
    %v1068 = vmax.f32 %v934, 0.0
    %v1069 = vmax.f32 %v937, 0.0
    %v1070 = vmax.f32 %v942, 0.0
    %v1071 = vmax.f32 %v945, 0.0
    %v1072 = vmax.f32 %v950, 0.0
    %v1073 = vmax.f32 %v953, 0.0
    %v1074 = vmax.f32 %v958, 0.0
    %v1075 = vmax.f32 %v961, 0.0
    %v1076 = vmax.f32 %v966, 0.0
    %v1077 = vmax.f32 %v969, 0.0
    %v1078 = vmax.f32 %v974, 0.0
    %v1079 = vmax.f32 %v977, 0.0
    %v1080 = vmax.f32 %v982, 0.0
    %v1081 = vmax.f32 %v985, 0.0
    %v1082 = vmax.f32 %v990, 0.0
    %v1083 = vmax.f32 %v993, 0.0
    %v1084 = vmax.f32 %v998, 0.0
    %v1085 = vmax.f32 %v1001, 0.0
    %v1086 = vmax.f32 %v1006, 0.0
    %v1087 = vmax.f32 %v1009, 0.0
    %v1088 = vmax.f32 %v1014, 0.0
    %v1089 = vmax.f32 %v1017, 0.0
    %v1090 = vmax.f32 %v1022, 0.0
    %v1091 = vmax.f32 %v1025, 0.0
    %v1092 = vld [vmem:[%s3] sm:$0xff]
    %v1093 = vld [vmem:[%s3 + $0x8] sm:$0xff]
    %v1094 = vld [vmem:[%s3 + $0x10] sm:$0xff]
    %v1095 = vld [vmem:[%s3 + $0x18] sm:$0xff]
    %v1096 = vld [vmem:[%s3 + $0x20] sm:$0xff]
    %v1097 = vld [vmem:[%s3 + $0x28] sm:$0xff]
    %v1098 = vld [vmem:[%s3 + $0x30] sm:$0xff]
    %v1099 = vld [vmem:[%s3 + $0x38] sm:$0xff]
    %v1100 = vld [vmem:[%s3 + $0x40] sm:$0xff]
    %v1101 = vld [vmem:[%s3 + $0x48] sm:$0xff]
    %v1102 = vld [vmem:[%s3 + $0x50] sm:$0xff]
    %v1103 = vld [vmem:[%s3 + $0x58] sm:$0xff]
    %v1104 = vld [vmem:[%s3 + $0x60] sm:$0xff]
    %v1105 = vld [vmem:[%s3 + $0x68] sm:$0xff]
    %v1106 = vld [vmem:[%s3 + $0x70] sm:$0xff]
    %v1107 = vld [vmem:[%s3 + $0x78] sm:$0xff]
    %v1108 = vld [vmem:[%s3 + $0x80] sm:$0xff]
    %v1109 = vld [vmem:[%s3 + $0x88] sm:$0xff]
    %v1110 = vld [vmem:[%s3 + $0x90] sm:$0xff]
    %v1111 = vld [vmem:[%s3 + $0x98] sm:$0xff]
    %v1112 = vld [vmem:[%s3 + $0xa0] sm:$0xff]
    %v1113 = vld [vmem:[%s3 + $0xa8] sm:$0xff]
    %v1114 = vld [vmem:[%s3 + $0xb0] sm:$0xff]
    %v1115 = vld [vmem:[%s3 + $0xb8] sm:$0xff]
    %v1116 = vld [vmem:[%s3 + $0xc0] sm:$0xff]
    %v1117 = vld [vmem:[%s3 + $0xc8] sm:$0xff]
    %v1118 = vld [vmem:[%s3 + $0xd0] sm:$0xff]
    %v1119 = vld [vmem:[%s3 + $0xd8] sm:$0xff]
    %v1120 = vld [vmem:[%s3 + $0xe0] sm:$0xff]
    %v1121 = vld [vmem:[%s3 + $0xe8] sm:$0xff]
    %v1122 = vld [vmem:[%s3 + $0xf0] sm:$0xff]
    %v1123 = vld [vmem:[%s3 + $0xf8] sm:$0xff]
    %v1124 = vpack.c.bf16 %v1029, %v1028
    %v1125 = vpack.c.bf16 %v1031, %v1030
    %v1126 = vpack.c.bf16 %v1033, %v1032
    %v1127 = vpack.c.bf16 %v1035, %v1034
    %v1128 = vpack.c.bf16 %v1037, %v1036
    %v1129 = vpack.c.bf16 %v1039, %v1038
    %v1130 = vpack.c.bf16 %v1041, %v1040
    %v1131 = vpack.c.bf16 %v1043, %v1042
    %v1132 = vpack.c.bf16 %v1045, %v1044
    %v1133 = vpack.c.bf16 %v1047, %v1046
    %v1134 = vpack.c.bf16 %v1049, %v1048
    %v1135 = vpack.c.bf16 %v1051, %v1050
    %v1136 = vpack.c.bf16 %v1053, %v1052
    %v1137 = vpack.c.bf16 %v1055, %v1054
    %v1138 = vpack.c.bf16 %v1057, %v1056
    %v1139 = vpack.c.bf16 %v1059, %v1058
    %v1140 = vpack.c.bf16 %v1061, %v1060
    %v1141 = vpack.c.bf16 %v1063, %v1062
    %v1142 = vpack.c.bf16 %v1065, %v1064
    %v1143 = vpack.c.bf16 %v1067, %v1066
    %v1144 = vpack.c.bf16 %v1069, %v1068
    %v1145 = vpack.c.bf16 %v1071, %v1070
    %v1146 = vpack.c.bf16 %v1073, %v1072
    %v1147 = vpack.c.bf16 %v1075, %v1074
    %v1148 = vpack.c.bf16 %v1077, %v1076
    %v1149 = vpack.c.bf16 %v1079, %v1078
    %v1150 = vpack.c.bf16 %v1081, %v1080
    %v1151 = vpack.c.bf16 %v1083, %v1082
    %v1152 = vpack.c.bf16 %v1085, %v1084
    %v1153 = vpack.c.bf16 %v1087, %v1086
    %v1154 = vpack.c.bf16 %v1089, %v1088
    %v1155 = vpack.c.bf16 %v1091, %v1090
    %v1156 = vld [vmem:[%s4] sm:$0xff]
    %v1157 = vld [vmem:[%s4 + $0x8] sm:$0xff]
    %v1158 = vld [vmem:[%s4 + $0x10] sm:$0xff]
    %v1159 = vld [vmem:[%s4 + $0x18] sm:$0xff]
    %v1160 = vld [vmem:[%s4 + $0x20] sm:$0xff]
    %v1161 = vld [vmem:[%s4 + $0x28] sm:$0xff]
    %v1162 = vld [vmem:[%s4 + $0x30] sm:$0xff]
    %v1163 = vld [vmem:[%s4 + $0x38] sm:$0xff]
    %v1164 = vld [vmem:[%s4 + $0x40] sm:$0xff]
    %v1165 = vld [vmem:[%s4 + $0x48] sm:$0xff]
    %v1166 = vld [vmem:[%s4 + $0x50] sm:$0xff]
    %v1167 = vld [vmem:[%s4 + $0x58] sm:$0xff]
    %v1168 = vld [vmem:[%s4 + $0x60] sm:$0xff]
    %v1169 = vld [vmem:[%s4 + $0x68] sm:$0xff]
    %v1170 = vld [vmem:[%s4 + $0x70] sm:$0xff]
    %v1171 = vld [vmem:[%s4 + $0x78] sm:$0xff]
    %1173 = vset.pattern.permute.xlu0 0
    %1174 = vperm.xlu0 %1173, %v1156
    %v1175 = vpop.permute.xlu0 %1174
    %1178 = vset.pattern.permute.xlu0 0
    %1179 = vperm.xlu0 %1178, %v1157
    %v1180 = vpop.permute.xlu0 %1179
    %1183 = vset.pattern.permute.xlu0 0
    %1184 = vperm.xlu0 %1183, %v1158
    %v1185 = vpop.permute.xlu0 %1184
    %1188 = vset.pattern.permute.xlu0 0
    %1189 = vperm.xlu0 %1188, %v1159
    %v1190 = vpop.permute.xlu0 %1189
    %1193 = vset.pattern.permute.xlu0 0
    %1194 = vperm.xlu0 %1193, %v1160
    %v1195 = vpop.permute.xlu0 %1194
    %1198 = vset.pattern.permute.xlu0 0
    %1199 = vperm.xlu0 %1198, %v1161
    %v1200 = vpop.permute.xlu0 %1199
    %1203 = vset.pattern.permute.xlu0 0
    %1204 = vperm.xlu0 %1203, %v1162
    %v1205 = vpop.permute.xlu0 %1204
    %1208 = vset.pattern.permute.xlu0 0
    %1209 = vperm.xlu0 %1208, %v1163
    %v1210 = vpop.permute.xlu0 %1209
    %1213 = vset.pattern.permute.xlu0 0
    %1214 = vperm.xlu0 %1213, %v1164
    %v1215 = vpop.permute.xlu0 %1214
    %1218 = vset.pattern.permute.xlu0 0
    %1219 = vperm.xlu0 %1218, %v1165
    %v1220 = vpop.permute.xlu0 %1219
    %1223 = vset.pattern.permute.xlu0 0
    %1224 = vperm.xlu0 %1223, %v1166
    %v1225 = vpop.permute.xlu0 %1224
    %1228 = vset.pattern.permute.xlu0 0
    %1229 = vperm.xlu0 %1228, %v1167
    %v1230 = vpop.permute.xlu0 %1229
    %1233 = vset.pattern.permute.xlu0 0
    %1234 = vperm.xlu0 %1233, %v1168
    %v1235 = vpop.permute.xlu0 %1234
    %1238 = vset.pattern.permute.xlu0 0
    %1239 = vperm.xlu0 %1238, %v1169
    %v1240 = vpop.permute.xlu0 %1239
    %1243 = vset.pattern.permute.xlu0 0
    %1244 = vperm.xlu0 %1243, %v1170
    %v1245 = vpop.permute.xlu0 %1244
    %1248 = vset.pattern.permute.xlu0 0
    %1249 = vperm.xlu0 %1248, %v1171
    %v1250 = vpop.permute.xlu0 %1249
    %v1284 = vunpack.c.l.b16 %v1092
    %v1285 = vunpack.c.h.b16 %v1092
    %v1286 = vunpack.c.l.b16 %v1093
    %v1287 = vunpack.c.h.b16 %v1093
    %v1288 = vunpack.c.l.b16 %v1094
    %v1289 = vunpack.c.h.b16 %v1094
    %v1290 = vunpack.c.l.b16 %v1095
    %v1291 = vunpack.c.h.b16 %v1095
    %v1292 = vunpack.c.l.b16 %v1096
    %v1293 = vunpack.c.h.b16 %v1096
    %v1294 = vunpack.c.l.b16 %v1097
    %v1295 = vunpack.c.h.b16 %v1097
    %v1296 = vunpack.c.l.b16 %v1098
    %v1297 = vunpack.c.h.b16 %v1098
    %v1298 = vunpack.c.l.b16 %v1099
    %v1299 = vunpack.c.h.b16 %v1099
    %v1300 = vunpack.c.l.b16 %v1100
    %v1301 = vunpack.c.h.b16 %v1100
    %v1302 = vunpack.c.l.b16 %v1101
    %v1303 = vunpack.c.h.b16 %v1101
    %v1304 = vunpack.c.l.b16 %v1102
    %v1305 = vunpack.c.h.b16 %v1102
    %v1306 = vunpack.c.l.b16 %v1103
    %v1307 = vunpack.c.h.b16 %v1103
    %v1308 = vunpack.c.l.b16 %v1104
    %v1309 = vunpack.c.h.b16 %v1104
    %v1310 = vunpack.c.l.b16 %v1105
    %v1311 = vunpack.c.h.b16 %v1105
    %v1312 = vunpack.c.l.b16 %v1106
    %v1313 = vunpack.c.h.b16 %v1106
    %v1314 = vunpack.c.l.b16 %v1107
    %v1315 = vunpack.c.h.b16 %v1107
    %v1316 = vunpack.c.l.b16 %v1108
    %v1317 = vunpack.c.h.b16 %v1108
    %v1318 = vunpack.c.l.b16 %v1109
    %v1319 = vunpack.c.h.b16 %v1109
    %v1320 = vunpack.c.l.b16 %v1110
    %v1321 = vunpack.c.h.b16 %v1110
    %v1322 = vunpack.c.l.b16 %v1111
    %v1323 = vunpack.c.h.b16 %v1111
    %v1324 = vunpack.c.l.b16 %v1112
    %v1325 = vunpack.c.h.b16 %v1112
    %v1326 = vunpack.c.l.b16 %v1113
    %v1327 = vunpack.c.h.b16 %v1113
    %v1328 = vunpack.c.l.b16 %v1114
    %v1329 = vunpack.c.h.b16 %v1114
    %v1330 = vunpack.c.l.b16 %v1115
    %v1331 = vunpack.c.h.b16 %v1115
    %v1332 = vunpack.c.l.b16 %v1116
    %v1333 = vunpack.c.h.b16 %v1116
    %v1334 = vunpack.c.l.b16 %v1117
    %v1335 = vunpack.c.h.b16 %v1117
    %v1336 = vunpack.c.l.b16 %v1118
    %v1337 = vunpack.c.h.b16 %v1118
    %v1338 = vunpack.c.l.b16 %v1119
    %v1339 = vunpack.c.h.b16 %v1119
    %v1340 = vunpack.c.l.b16 %v1120
    %v1341 = vunpack.c.h.b16 %v1120
    %v1342 = vunpack.c.l.b16 %v1121
    %v1343 = vunpack.c.h.b16 %v1121
    %v1344 = vunpack.c.l.b16 %v1122
    %v1345 = vunpack.c.h.b16 %v1122
    %v1346 = vunpack.c.l.b16 %v1123
    %v1347 = vunpack.c.h.b16 %v1123
    %v1348 = vpack.c.b16 %v1288, %v1284
    %v1349 = vpack.c.b16 %v1289, %v1285
    %v1350 = vpack.c.b16 %v1290, %v1286
    %v1351 = vpack.c.b16 %v1291, %v1287
    %v1352 = vpack.c.b16 %v1296, %v1292
    %v1353 = vpack.c.b16 %v1297, %v1293
    %v1354 = vpack.c.b16 %v1298, %v1294
    %v1355 = vpack.c.b16 %v1299, %v1295
    %v1356 = vpack.c.b16 %v1304, %v1300
    %v1357 = vpack.c.b16 %v1305, %v1301
    %v1358 = vpack.c.b16 %v1306, %v1302
    %v1359 = vpack.c.b16 %v1307, %v1303
    %v1360 = vpack.c.b16 %v1312, %v1308
    %v1361 = vpack.c.b16 %v1313, %v1309
    %v1362 = vpack.c.b16 %v1314, %v1310
    %v1363 = vpack.c.b16 %v1315, %v1311
    %v1364 = vpack.c.b16 %v1320, %v1316
    %v1365 = vpack.c.b16 %v1321, %v1317
    %v1366 = vpack.c.b16 %v1322, %v1318
    %v1367 = vpack.c.b16 %v1323, %v1319
    %v1368 = vpack.c.b16 %v1328, %v1324
    %v1369 = vpack.c.b16 %v1329, %v1325
    %v1370 = vpack.c.b16 %v1330, %v1326
    %v1371 = vpack.c.b16 %v1331, %v1327
    %v1372 = vpack.c.b16 %v1336, %v1332
    %v1373 = vpack.c.b16 %v1337, %v1333
    %v1374 = vpack.c.b16 %v1338, %v1334
    %v1375 = vpack.c.b16 %v1339, %v1335
    %v1376 = vpack.c.b16 %v1344, %v1340
    %v1377 = vpack.c.b16 %v1345, %v1341
    %v1378 = vpack.c.b16 %v1346, %v1342
    %v1379 = vpack.c.b16 %v1347, %v1343
    %1412 = vmatprep.subr.bf16.mxu0 0
    %1413 = vmatpush1.bf16.msra.mxu0 %v1124
    %1414 = vmatprep.subr.bf16.mxu0 0
    %1415 = vmatpush1.bf16.msra.mxu0 %v1125
    %1416 = vmatprep.subr.bf16.mxu0 0
    %1417 = vmatpush1.bf16.msra.mxu0 %v1126
    %1418 = vmatprep.subr.bf16.mxu0 0
    %1419 = vmatpush1.bf16.msra.mxu0 %v1127
    %1420 = vmatprep.subr.bf16.mxu0 0
    %1421 = vmatpush1.bf16.msra.mxu0 %v1128
    %1422 = vmatprep.subr.bf16.mxu0 0
    %1423 = vmatpush1.bf16.msra.mxu0 %v1129
    %1424 = vmatprep.subr.bf16.mxu0 0
    %1425 = vmatpush1.bf16.msra.mxu0 %v1130
    %1426 = vmatprep.subr.bf16.mxu0 0
    %1427 = vmatpush1.bf16.msra.mxu0 %v1131
    %1428 = vmatprep.subr.bf16.mxu0 0
    %1429 = vmatpush1.bf16.msra.mxu0 %v1132
    %1430 = vmatprep.subr.bf16.mxu0 0
    %1431 = vmatpush1.bf16.msra.mxu0 %v1133
    %1432 = vmatprep.subr.bf16.mxu0 0
    %1433 = vmatpush1.bf16.msra.mxu0 %v1134
    %1434 = vmatprep.subr.bf16.mxu0 0
    %1435 = vmatpush1.bf16.msra.mxu0 %v1135
    %1436 = vmatprep.subr.bf16.mxu0 0
    %1437 = vmatpush1.bf16.msra.mxu0 %v1136
    %1438 = vmatprep.subr.bf16.mxu0 0
    %1439 = vmatpush1.bf16.msra.mxu0 %v1137
    %1440 = vmatprep.subr.bf16.mxu0 0
    %1441 = vmatpush1.bf16.msra.mxu0 %v1138
    %1442 = vmatprep.subr.bf16.mxu0 0
    %1443 = vmatpush1.bf16.msra.mxu0 %v1139
    %1444 = vmatprep.mubr.bf16.mxu0 %v1349
    %1445 = vmatmul.mubr.bf16.gmra.mrb[0].mxu0 %v1348
    %v1446 = vpop.f32.mrb[0].mxu0
    %v1447 = vadd.f32 %v1175, %v1446
    %v1448 = vpop.f32.mrb[0].mxu0
    %v1449 = vpop.f32.mrb[0].mxu0
    %v1450 = vadd.f32 %v1180, %v1449
    %v1451 = vpop.f32.mrb[0].mxu0
    %1452 = vmatprep.mubr.bf16.mxu0 %v1353
    %1453 = vmatmul.mubr.bf16.gmra.mrb[0].mxu0 %v1352
    %v1454 = vpop.f32.mrb[0].mxu0
    %v1455 = vadd.f32 %v1185, %v1454
    %v1456 = vpop.f32.mrb[0].mxu0
    %v1457 = vpop.f32.mrb[0].mxu0
    %v1458 = vadd.f32 %v1190, %v1457
    %v1459 = vpop.f32.mrb[0].mxu0
    %1460 = vmatprep.mubr.bf16.mxu0 %v1357
    %1461 = vmatmul.mubr.bf16.gmra.mrb[0].mxu0 %v1356
    %v1462 = vpop.f32.mrb[0].mxu0
    %v1463 = vadd.f32 %v1195, %v1462
    %v1464 = vpop.f32.mrb[0].mxu0
    %v1465 = vpop.f32.mrb[0].mxu0
    %v1466 = vadd.f32 %v1200, %v1465
    %v1467 = vpop.f32.mrb[0].mxu0
    %1468 = vmatprep.mubr.bf16.mxu0 %v1361
    %1469 = vmatmul.mubr.bf16.gmra.mrb[0].mxu0 %v1360
    %v1470 = vpop.f32.mrb[0].mxu0
    %v1471 = vadd.f32 %v1205, %v1470
    %v1472 = vpop.f32.mrb[0].mxu0
    %v1473 = vpop.f32.mrb[0].mxu0
    %v1474 = vadd.f32 %v1210, %v1473
    %v1475 = vpop.f32.mrb[0].mxu0
    %1476 = vmatprep.mubr.bf16.mxu0 %v1365
    %1477 = vmatmul.mubr.bf16.gmra.mrb[0].mxu0 %v1364
    %v1478 = vpop.f32.mrb[0].mxu0
    %v1479 = vadd.f32 %v1215, %v1478
    %v1480 = vpop.f32.mrb[0].mxu0
    %v1481 = vpop.f32.mrb[0].mxu0
    %v1482 = vadd.f32 %v1220, %v1481
    %v1483 = vpop.f32.mrb[0].mxu0
    %1484 = vmatprep.mubr.bf16.mxu0 %v1369
    %1485 = vmatmul.mubr.bf16.gmra.mrb[0].mxu0 %v1368
    %v1486 = vpop.f32.mrb[0].mxu0
    %v1487 = vadd.f32 %v1225, %v1486
    %v1488 = vpop.f32.mrb[0].mxu0
    %v1489 = vpop.f32.mrb[0].mxu0
    %v1490 = vadd.f32 %v1230, %v1489
    %v1491 = vpop.f32.mrb[0].mxu0
    %1492 = vmatprep.mubr.bf16.mxu0 %v1373
    %1493 = vmatmul.mubr.bf16.gmra.mrb[0].mxu0 %v1372
    %v1494 = vpop.f32.mrb[0].mxu0
    %v1495 = vadd.f32 %v1235, %v1494
    %v1496 = vpop.f32.mrb[0].mxu0
    %v1497 = vpop.f32.mrb[0].mxu0
    %v1498 = vadd.f32 %v1240, %v1497
    %v1499 = vpop.f32.mrb[0].mxu0
    %1500 = vmatprep.mubr.bf16.mxu0 %v1377
    %1501 = vmatmul.mubr.bf16.gmra.mrb[0].mxu0 %v1376
    %v1502 = vpop.f32.mrb[0].mxu0
    %v1503 = vadd.f32 %v1245, %v1502
    %v1504 = vpop.f32.mrb[0].mxu0
    %v1505 = vpop.f32.mrb[0].mxu0
    %v1506 = vadd.f32 %v1250, %v1505
    %v1507 = vpop.f32.mrb[0].mxu0
    %1508 = vdwg.mxu0
    %1509 = vmatprep.subr.bf16.mxu0 0
    %1510 = vmatpush1.bf16.msra.mxu0 %v1140
    %1511 = vmatprep.subr.bf16.mxu0 0
    %1512 = vmatpush1.bf16.msra.mxu0 %v1141
    %1513 = vmatprep.subr.bf16.mxu0 0
    %1514 = vmatpush1.bf16.msra.mxu0 %v1142
    %1515 = vmatprep.subr.bf16.mxu0 0
    %1516 = vmatpush1.bf16.msra.mxu0 %v1143
    %1517 = vmatprep.subr.bf16.mxu0 0
    %1518 = vmatpush1.bf16.msra.mxu0 %v1144
    %1519 = vmatprep.subr.bf16.mxu0 0
    %1520 = vmatpush1.bf16.msra.mxu0 %v1145
    %1521 = vmatprep.subr.bf16.mxu0 0
    %1522 = vmatpush1.bf16.msra.mxu0 %v1146
    %1523 = vmatprep.subr.bf16.mxu0 0
    %1524 = vmatpush1.bf16.msra.mxu0 %v1147
    %1525 = vmatprep.subr.bf16.mxu0 0
    %1526 = vmatpush1.bf16.msra.mxu0 %v1148
    %1527 = vmatprep.subr.bf16.mxu0 0
    %1528 = vmatpush1.bf16.msra.mxu0 %v1149
    %1529 = vmatprep.subr.bf16.mxu0 0
    %1530 = vmatpush1.bf16.msra.mxu0 %v1150
    %1531 = vmatprep.subr.bf16.mxu0 0
    %1532 = vmatpush1.bf16.msra.mxu0 %v1151
    %1533 = vmatprep.subr.bf16.mxu0 0
    %1534 = vmatpush1.bf16.msra.mxu0 %v1152
    %1535 = vmatprep.subr.bf16.mxu0 0
    %1536 = vmatpush1.bf16.msra.mxu0 %v1153
    %1537 = vmatprep.subr.bf16.mxu0 0
    %1538 = vmatpush1.bf16.msra.mxu0 %v1154
    %1539 = vmatprep.subr.bf16.mxu0 0
    %1540 = vmatpush1.bf16.msra.mxu0 %v1155
    %1541 = vmatprep.mubr.bf16.mxu0 %v1351
    %1542 = vmatmul.mubr.bf16.gmra.mrb[0].mxu0 %v1350
    %v1543 = vpop.f32.mrb[0].mxu0
    %v1544 = vadd.f32 %v1447, %v1543
    %v1545 = vpop.f32.mrb[0].mxu0
    %v1546 = vpop.f32.mrb[0].mxu0
    %v1547 = vadd.f32 %v1450, %v1546
    %v1548 = vpop.f32.mrb[0].mxu0
    %1549 = vmatprep.mubr.bf16.mxu0 %v1355
    %1550 = vmatmul.mubr.bf16.gmra.mrb[0].mxu0 %v1354
    %v1551 = vpop.f32.mrb[0].mxu0
    %v1552 = vadd.f32 %v1455, %v1551
    %v1553 = vpop.f32.mrb[0].mxu0
    %v1554 = vpop.f32.mrb[0].mxu0
    %v1555 = vadd.f32 %v1458, %v1554
    %v1556 = vpop.f32.mrb[0].mxu0
    %1557 = vmatprep.mubr.bf16.mxu0 %v1359
    %1558 = vmatmul.mubr.bf16.gmra.mrb[0].mxu0 %v1358
    %v1559 = vpop.f32.mrb[0].mxu0
    %v1560 = vadd.f32 %v1463, %v1559
    %v1561 = vpop.f32.mrb[0].mxu0
    %v1562 = vpop.f32.mrb[0].mxu0
    %v1563 = vadd.f32 %v1466, %v1562
    %v1564 = vpop.f32.mrb[0].mxu0
    %1565 = vmatprep.mubr.bf16.mxu0 %v1363
    %1566 = vmatmul.mubr.bf16.gmra.mrb[0].mxu0 %v1362
    %v1567 = vpop.f32.mrb[0].mxu0
    %v1568 = vadd.f32 %v1471, %v1567
    %v1569 = vpop.f32.mrb[0].mxu0
    %v1570 = vpop.f32.mrb[0].mxu0
    %v1571 = vadd.f32 %v1474, %v1570
    %v1572 = vpop.f32.mrb[0].mxu0
    %1573 = vmatprep.mubr.bf16.mxu0 %v1367
    %1574 = vmatmul.mubr.bf16.gmra.mrb[0].mxu0 %v1366
    %v1575 = vpop.f32.mrb[0].mxu0
    %v1576 = vadd.f32 %v1479, %v1575
    %v1577 = vpop.f32.mrb[0].mxu0
    %v1578 = vpop.f32.mrb[0].mxu0
    %v1579 = vadd.f32 %v1482, %v1578
    %v1580 = vpop.f32.mrb[0].mxu0
    %1581 = vmatprep.mubr.bf16.mxu0 %v1371
    %1582 = vmatmul.mubr.bf16.gmra.mrb[0].mxu0 %v1370
    %v1583 = vpop.f32.mrb[0].mxu0
    %v1584 = vadd.f32 %v1487, %v1583
    %v1585 = vpop.f32.mrb[0].mxu0
    %v1586 = vpop.f32.mrb[0].mxu0
    %v1587 = vadd.f32 %v1490, %v1586
    %v1588 = vpop.f32.mrb[0].mxu0
    %1589 = vmatprep.mubr.bf16.mxu0 %v1375
    %1590 = vmatmul.mubr.bf16.gmra.mrb[0].mxu0 %v1374
    %v1591 = vpop.f32.mrb[0].mxu0
    %v1592 = vadd.f32 %v1495, %v1591
    %v1593 = vpop.f32.mrb[0].mxu0
    %v1594 = vpop.f32.mrb[0].mxu0
    %v1595 = vadd.f32 %v1498, %v1594
    %v1596 = vpop.f32.mrb[0].mxu0
    %1597 = vmatprep.mubr.bf16.mxu0 %v1379
    %1598 = vmatmul.mubr.bf16.gmra.mrb[0].mxu0 %v1378
    %v1599 = vpop.f32.mrb[0].mxu0
    %v1600 = vadd.f32 %v1503, %v1599
    %v1601 = vpop.f32.mrb[0].mxu0
    %v1602 = vpop.f32.mrb[0].mxu0
    %v1603 = vadd.f32 %v1506, %v1602
    %v1604 = vpop.f32.mrb[0].mxu0
    %1605 = vdwg.mxu0
    %v1606 = vmax.f32 %v1544, 0.0
    %v1607 = vmax.f32 %v1547, 0.0
    %v1608 = vmax.f32 %v1552, 0.0
    %v1609 = vmax.f32 %v1555, 0.0
    %v1610 = vmax.f32 %v1560, 0.0
    %v1611 = vmax.f32 %v1563, 0.0
    %v1612 = vmax.f32 %v1568, 0.0
    %v1613 = vmax.f32 %v1571, 0.0
    %v1614 = vmax.f32 %v1576, 0.0
    %v1615 = vmax.f32 %v1579, 0.0
    %v1616 = vmax.f32 %v1584, 0.0
    %v1617 = vmax.f32 %v1587, 0.0
    %v1618 = vmax.f32 %v1592, 0.0
    %v1619 = vmax.f32 %v1595, 0.0
    %v1620 = vmax.f32 %v1600, 0.0
    %v1621 = vmax.f32 %v1603, 0.0
    %v1622 = vld [vmem:[%s5] sm:$0xff]
    %v1623 = vld [vmem:[%s5 + $0x8] sm:$0xff]
    %v1624 = vld [vmem:[%s5 + $0x10] sm:$0xff]
    %v1625 = vld [vmem:[%s5 + $0x18] sm:$0xff]
    %v1626 = vld [vmem:[%s5 + $0x20] sm:$0xff]
    %v1627 = vld [vmem:[%s5 + $0x28] sm:$0xff]
    %v1628 = vld [vmem:[%s5 + $0x30] sm:$0xff]
    %v1629 = vld [vmem:[%s5 + $0x38] sm:$0xff]
    %v1630 = vld [vmem:[%s5 + $0x40] sm:$0xff]
    %v1631 = vld [vmem:[%s5 + $0x48] sm:$0xff]
    %v1632 = vld [vmem:[%s5 + $0x50] sm:$0xff]
    %v1633 = vld [vmem:[%s5 + $0x58] sm:$0xff]
    %v1634 = vld [vmem:[%s5 + $0x60] sm:$0xff]
    %v1635 = vld [vmem:[%s5 + $0x68] sm:$0xff]
    %v1636 = vld [vmem:[%s5 + $0x70] sm:$0xff]
    %v1637 = vld [vmem:[%s5 + $0x78] sm:$0xff]
    %1639 = vset.pattern.permute.xlu0 0
    %1640 = vperm.xlu0 %1639, %v1622
    %v1641 = vpop.permute.xlu0 %1640
    %1644 = vset.pattern.permute.xlu0 0
    %1645 = vperm.xlu0 %1644, %v1623
    %v1646 = vpop.permute.xlu0 %1645
    %1649 = vset.pattern.permute.xlu0 0
    %1650 = vperm.xlu0 %1649, %v1624
    %v1651 = vpop.permute.xlu0 %1650
    %1654 = vset.pattern.permute.xlu0 0
    %1655 = vperm.xlu0 %1654, %v1625
    %v1656 = vpop.permute.xlu0 %1655
    %1659 = vset.pattern.permute.xlu0 0
    %1660 = vperm.xlu0 %1659, %v1626
    %v1661 = vpop.permute.xlu0 %1660
    %1664 = vset.pattern.permute.xlu0 0
    %1665 = vperm.xlu0 %1664, %v1627
    %v1666 = vpop.permute.xlu0 %1665
    %1669 = vset.pattern.permute.xlu0 0
    %1670 = vperm.xlu0 %1669, %v1628
    %v1671 = vpop.permute.xlu0 %1670
    %1674 = vset.pattern.permute.xlu0 0
    %1675 = vperm.xlu0 %1674, %v1629
    %v1676 = vpop.permute.xlu0 %1675
    %1679 = vset.pattern.permute.xlu0 0
    %1680 = vperm.xlu0 %1679, %v1630
    %v1681 = vpop.permute.xlu0 %1680
    %1684 = vset.pattern.permute.xlu0 0
    %1685 = vperm.xlu0 %1684, %v1631
    %v1686 = vpop.permute.xlu0 %1685
    %1689 = vset.pattern.permute.xlu0 0
    %1690 = vperm.xlu0 %1689, %v1632
    %v1691 = vpop.permute.xlu0 %1690
    %1694 = vset.pattern.permute.xlu0 0
    %1695 = vperm.xlu0 %1694, %v1633
    %v1696 = vpop.permute.xlu0 %1695
    %1699 = vset.pattern.permute.xlu0 0
    %1700 = vperm.xlu0 %1699, %v1634
    %v1701 = vpop.permute.xlu0 %1700
    %1704 = vset.pattern.permute.xlu0 0
    %1705 = vperm.xlu0 %1704, %v1635
    %v1706 = vpop.permute.xlu0 %1705
    %1709 = vset.pattern.permute.xlu0 0
    %1710 = vperm.xlu0 %1709, %v1636
    %v1711 = vpop.permute.xlu0 %1710
    %1714 = vset.pattern.permute.xlu0 0
    %1715 = vperm.xlu0 %1714, %v1637
    %v1716 = vpop.permute.xlu0 %1715
    %v1718 = vmul.f32 %v1606, %v1641
    %v1719 = vmul.f32 %v1607, %v1646
    %v1720 = vmul.f32 %v1608, %v1651
    %v1721 = vmul.f32 %v1609, %v1656
    %v1722 = vmul.f32 %v1610, %v1661
    %v1723 = vmul.f32 %v1611, %v1666
    %v1724 = vmul.f32 %v1612, %v1671
    %v1725 = vmul.f32 %v1613, %v1676
    %v1726 = vmul.f32 %v1614, %v1681
    %v1727 = vmul.f32 %v1615, %v1686
    %v1728 = vmul.f32 %v1616, %v1691
    %v1729 = vmul.f32 %v1617, %v1696
    %v1730 = vmul.f32 %v1618, %v1701
    %v1731 = vmul.f32 %v1619, %v1706
    %v1732 = vmul.f32 %v1620, %v1711
    %v1733 = vmul.f32 %v1621, %v1716
    %vm1734 = vcmask 64512
    %v1735 = vsel %vm1734, %v1718, 0.0
    %v1736 = vsel %vm1734, %v1719, 0.0
    %v1737 = vadd.f32 %v1735, %v1736
    %v1738 = vsel %vm1734, %v1720, 0.0
    %v1739 = vadd.f32 %v1737, %v1738
    %v1740 = vsel %vm1734, %v1721, 0.0
    %v1741 = vadd.f32 %v1739, %v1740
    %v1742 = vsel %vm1734, %v1722, 0.0
    %v1743 = vadd.f32 %v1741, %v1742
    %v1744 = vsel %vm1734, %v1723, 0.0
    %v1745 = vadd.f32 %v1743, %v1744
    %v1746 = vsel %vm1734, %v1724, 0.0
    %v1747 = vadd.f32 %v1745, %v1746
    %v1748 = vsel %vm1734, %v1725, 0.0
    %v1749 = vadd.f32 %v1747, %v1748
    %v1750 = vsel %vm1734, %v1726, 0.0
    %v1751 = vadd.f32 %v1749, %v1750
    %v1752 = vsel %vm1734, %v1727, 0.0
    %v1753 = vadd.f32 %v1751, %v1752
    %v1754 = vsel %vm1734, %v1728, 0.0
    %v1755 = vadd.f32 %v1753, %v1754
    %v1756 = vsel %vm1734, %v1729, 0.0
    %v1757 = vadd.f32 %v1755, %v1756
    %v1758 = vsel %vm1734, %v1730, 0.0
    %v1759 = vadd.f32 %v1757, %v1758
    %v1760 = vsel %vm1734, %v1731, 0.0
    %v1761 = vadd.f32 %v1759, %v1760
    %v1762 = vsel %vm1734, %v1732, 0.0
    %v1763 = vadd.f32 %v1761, %v1762
    %v1764 = vsel %vm1734, %v1733, 0.0
    %v1765 = vadd.f32 %v1763, %v1764
    %v1766 = vrot.slane %v1765, 4
    %v1767 = vadd.f32 %v1765, %v1766
    %v1768 = vrot.slane %v1767, 2
    %v1769 = vadd.f32 %v1767, %v1768
    %v1770 = vrot.slane %v1769, 1
    %v1771 = vadd.f32 %v1769, %v1770
    %s1772 = sld [smem:[#allocation2]]
    %v1773 = vstv %s1772
    %v1774 = vadd.f32 %v1771, %v1773
    %vm1775 = vcmask 57344
    %1776 = vst.msk [vmem:[#allocation3] sm:$0x1] %vm1775, %v1774
    // Predicated region
    $region30: #{regressor_forward.1} parent=1 // pred_check
      _
    $region31: #{regressor_forward.1} parent=1 // pred_check_branch
      %1778 = sbr.rel (0) target = $region33
    $region32: #{regressor_forward.1} parent=1 // pred_region
      %s1780 = ssub.s32 16, 16
      %1781 = vsyncadd [#allocation4], %s1780
      %s1783 = sshll.u32 [#allocation3], 4
      %s1784 = int_to_ptr.vmem [resolvable:$true] %s1783
      %1786 = dma.vmem_to_hbm [thread:$0]  %s1784, 16, %s7, [#allocation4]
    $region33: #{regressor_forward.1} parent=1 // pred_fallthru
      _
    // Predicated region
    $region34: #{regressor_forward.1} parent=1 // pred_check
      _
    $region35: #{regressor_forward.1} parent=1 // pred_check_branch
      %1788 = sbr.rel (0) target = $region37
    $region36: #{regressor_forward.1} parent=1 // pred_region
      %1789 = dma.done [#allocation4], 16
    $region37: #{regressor_forward.1} parent=1 // pred_fallthru
      _
    %1790 = vsyncpa [#allocation4], 1

</llo_original>
